<compile_context>
chip_gen: v7x
topology: tpu7x:2x2x1
jax: 0.10.0
libtpu: 0.0.40
codegen_flags: <defaults>
</compile_context>

<pallas_src>
import math

import numpy as np

import jax
import jax.numpy as jnp
from jax.experimental import pallas as pl
from jax.experimental.pallas import tpu as pltpu


def _pos_embed_kernel(y_ref, x_ref, cy_ref, cx_ref, ph_ref, out_ref):
    # y_ref, x_ref : (1, T)  float32   flattened y_embed / x_embed tiles (lane-dense)
    # cy_ref, cx_ref, ph_ref : (1, C) float32 per-channel coefficients / phase
    # out_ref      : (T, C)  out dtype
    y = y_ref[0][:, None]          # (T, 1)  lane->sublane relayout (cheap XLU, hidden by writes)
    x = x_ref[0][:, None]          # (T, 1)
    # Single fused expression; broadcasting (T,1)*(1,C) -> (T,C).
    angle = y * cy_ref[...] + x * cx_ref[...] + ph_ref[...]
    out_ref[...] = jnp.sin(angle).astype(out_ref.dtype)


def _choose_tile(n, c, out_itemsize, target_bytes=4 << 20, min_steps=4):
    """Row tile T for the (T, C) output block.

    T is a multiple of 128 (keeps the flat (1, T) input block lane-aligned and the output
    sublane dim aligned for f32/bf16) or T == n (full dim, always legal).  Targets ~4 MiB of
    output per step, while keeping >= min_steps grid steps when n is large enough (v7x
    megacore).  Prefers a divisor of n (no partial tiles); otherwise the last tile is partial
    and Pallas pads reads / masks the block write.
    """
    g = 128
    if n <= g:
        return n                                   # full-length block
    rows_target = max(g, (target_bytes // max(1, c * out_itemsize)) // g * g)
    rows_steps = max(g, (n // min_steps) // g * g)  # keep >= min_steps steps when possible
    cap = min(rows_target, rows_steps)
    for t in range(cap, g - 1, -g):                 # prefer a divisor of n
        if n % t == 0:
            return t
    return cap                                      # partial last tile


def position_embedding_sine_2d(mask, num_pos_feats=64, temperature=10000,
                               normalize=False, scale=None, *,
                               out_dtype=jnp.float32, channels_last=False):
    """mask: (B, H, W) bool (True = padded).

    Returns (B, 2*num_pos_feats, H, W) by default (PyTorch parity).  With channels_last=True
    returns (B, H, W, 2*num_pos_feats) directly from the kernel, skipping the full-tensor
    NCHW transpose (preferred when the consumer can take channels-last).
    """
    if scale is not None and normalize is False:
        raise ValueError("normalize should be True if scale is passed")
    if scale is None:
        scale = 2 * math.pi

    B, H, W = mask.shape
    F = num_pos_feats
    C = 2 * F
    N = B * H * W

    # --- tiny (B, H, W) preprocessing hoisted out of the kernel -------------------------
    not_mask = jnp.logical_not(mask).astype(jnp.float32)
    y_embed = jnp.cumsum(not_mask, axis=1)
    x_embed = jnp.cumsum(not_mask, axis=2)
    if normalize:
        eps = 1e-6
        y_embed = (y_embed - 0.5) / (y_embed[:, -1:, :] + eps) * scale
        x_embed = (x_embed - 0.5) / (x_embed[:, :, -1:] + eps) * scale

    # Flatten spatial+batch: lane-dense (1, N) rows feed the kernel; free reshape, no copies.
    y_flat = y_embed.reshape(1, N)
    x_flat = x_embed.reshape(1, N)

    # Per-channel coefficients (host-side constants): multiply by 1/dim_t (no in-kernel
    # divide) and add pi/2 on odd channels so a single sin produces the sin/cos interleave.
    k = np.arange(F, dtype=np.float32)
    dim_t = np.power(np.float32(temperature), 2.0 * np.floor(k / 2.0) / F).astype(np.float32)
    inv_dim_t = (1.0 / dim_t).astype(np.float32)
    zeros_f = np.zeros((F,), np.float32)
    phase_half = (np.arange(F) % 2).astype(np.float32) * np.float32(math.pi / 2.0)
    coef_y = np.concatenate([inv_dim_t, zeros_f]).reshape(1, C)   # y channels first
    coef_x = np.concatenate([zeros_f, inv_dim_t]).reshape(1, C)   # then x channels
    phase = np.concatenate([phase_half, phase_half]).reshape(1, C)

    # --- Pallas kernel: 1-D grid over N, channels-last lane-dense output ----------------
    out_dtype = jnp.dtype(out_dtype)
    T = _choose_tile(N, C, out_dtype.itemsize)
    grid = (pl.cdiv(N, T),)

    out = pl.pallas_call(
        _pos_embed_kernel,
        out_shape=jax.ShapeDtypeStruct((N, C), out_dtype),
        grid_spec=pltpu.PrefetchScalarGridSpec(
            num_scalar_prefetch=0,
            grid=grid,
            in_specs=[
                pl.BlockSpec((1, T), lambda i: (0, i)),    # y_embed tile (lane-dense)
                pl.BlockSpec((1, T), lambda i: (0, i)),    # x_embed tile
                pl.BlockSpec((1, C), lambda i: (0, 0)),    # coef_y
                pl.BlockSpec((1, C), lambda i: (0, 0)),    # coef_x
                pl.BlockSpec((1, C), lambda i: (0, 0)),    # phase
            ],
            out_specs=pl.BlockSpec((T, C), lambda i: (i, 0)),
        ),
        compiler_params=pltpu.CompilerParams(
            dimension_semantics=("parallel",),
            vmem_limit_bytes=32 * 1024 * 1024,
        ),
    )(y_flat, x_flat, coef_y, coef_x, phase)

    out = out.reshape(B, H, W, C)          # free metadata reshape
    if channels_last:
        return out
    # PyTorch-parity NCHW layout (costs one full-tensor transpose in XLA; pass
    # channels_last=True to skip it when the consumer can take channels-last).
    return jnp.transpose(out, (0, 3, 1, 2))


def _reference(mask, num_pos_feats=64, temperature=10000, normalize=False, scale=None):
    """Pure-JAX transcription of the PyTorch forward, for validation."""
    if scale is None:
        scale = 2 * math.pi
    not_mask = jnp.logical_not(mask).astype(jnp.float32)
    y_embed = jnp.cumsum(not_mask, axis=1)
    x_embed = jnp.cumsum(not_mask, axis=2)
    if normalize:
        eps = 1e-6
        y_embed = (y_embed - 0.5) / (y_embed[:, -1:, :] + eps) * scale
        x_embed = (x_embed - 0.5) / (x_embed[:, :, -1:] + eps) * scale
    dim_t = temperature ** (2 * (jnp.arange(num_pos_feats) // 2).astype(jnp.float32)
                            / num_pos_feats)
    pos_x = x_embed[..., None] / dim_t
    pos_y = y_embed[..., None] / dim_t
    B, H, W, F = pos_x.shape
    pos_x = jnp.stack([jnp.sin(pos_x[..., 0::2]), jnp.cos(pos_x[..., 1::2])],
                      axis=4).reshape(B, H, W, F)
    pos_y = jnp.stack([jnp.sin(pos_y[..., 0::2]), jnp.cos(pos_y[..., 1::2])],
                      axis=4).reshape(B, H, W, F)
    pos = jnp.concatenate([pos_y, pos_x], axis=3).transpose(0, 3, 1, 2)
    return pos


if __name__ == "__main__":
    key = jax.random.PRNGKey(0)
    kx, km, km2 = jax.random.split(key, 3)

    B, Cimg, H, W = 2, 4, 16, 16
    num_pos_feats = 64  # -> 2F = 128 output channels (one full lane width)

    # NestedTensor equivalent: image tensor (unused by the embedding math) + padding mask.
    x = jax.random.normal(kx, (B, Cimg, H, W), dtype=jnp.float32)
    mask = jax.random.bernoulli(km, 0.3, (B, H, W))  # True = padded

    # normalize=False (module default), PyTorch NCHW layout
    pos = position_embedding_sine_2d(mask, num_pos_feats=num_pos_feats)
    pos = jax.block_until_ready(pos)
    ref = _reference(mask, num_pos_feats=num_pos_feats)
    assert pos.shape == (B, 2 * num_pos_feats, H, W)
    assert jnp.allclose(pos, ref, atol=1e-4, rtol=1e-4)

    # normalize=True (DETR usage)
    pos_n = position_embedding_sine_2d(mask, num_pos_feats=num_pos_feats, normalize=True)
    ref_n = _reference(mask, num_pos_feats=num_pos_feats, normalize=True)
    assert jnp.allclose(jax.block_until_ready(pos_n), ref_n, atol=1e-4, rtol=1e-4)

    # channels-last path (skips the NCHW transpose entirely)
    pos_cl = position_embedding_sine_2d(mask, num_pos_feats=num_pos_feats, normalize=True,
                                        channels_last=True)
    assert jnp.allclose(jax.block_until_ready(pos_cl),
                        jnp.transpose(ref_n, (0, 2, 3, 1)), atol=1e-4, rtol=1e-4)

    # Ragged case: N = 1*10*15 = 150 exercises a partial last tile (masked block write).
    mask_r = jax.random.bernoulli(km2, 0.3, (1, 10, 15))
    pos_r = position_embedding_sine_2d(mask_r, num_pos_feats=num_pos_feats, normalize=True)
    ref_r = _reference(mask_r, num_pos_feats=num_pos_feats, normalize=True)
    assert jnp.allclose(jax.block_until_ready(pos_r), ref_r, atol=1e-4, rtol=1e-4)

    # bf16-output option (halves HBM write bytes; angle + sin still in f32).
    pos_bf = position_embedding_sine_2d(mask, num_pos_feats=num_pos_feats, normalize=True,
                                        out_dtype=jnp.bfloat16, channels_last=True)
    assert jnp.allclose(jax.block_until_ready(pos_bf).astype(jnp.float32),
                        jnp.transpose(ref_n, (0, 2, 3, 1)), atol=2e-2, rtol=2e-2)

    print("KERNEL_OK")
</pallas_src>

<mosaic_0001>
module attributes {stable_mosaic.version = 11 : i64} {
  func.func @_pos_embed_kernel(%arg0: i32, %arg1: memref<1x128xf32, #tpu.memory_space<vmem>>, %arg2: memref<1x128xf32, #tpu.memory_space<vmem>>, %arg3: memref<1x128xf32, #tpu.memory_space<vmem>>, %arg4: memref<1x128xf32, #tpu.memory_space<vmem>>, %arg5: memref<1x128xf32, #tpu.memory_space<vmem>>, %arg6: memref<128x128xf32, #tpu.memory_space<vmem>>) attributes {dimension_semantics = [#tpu.dimension_semantics<parallel>], iteration_bounds = array<i64: 4>, scalar_prefetch = 0 : i64, scratch_operands = 0 : i64, tpu.core_type = #tpu.core_type<tc>, window_params = [{transform_indices = @transform_0, window_bounds = array<i64: 1, 128>}, {transform_indices = @transform_1, window_bounds = array<i64: 1, 128>}, {pipeline_mode = #tpu.pipeline_mode<synchronous>, transform_indices = @transform_2, window_bounds = array<i64: 1, 128>}, {pipeline_mode = #tpu.pipeline_mode<synchronous>, transform_indices = @transform_3, window_bounds = array<i64: 1, 128>}, {pipeline_mode = #tpu.pipeline_mode<synchronous>, transform_indices = @transform_4, window_bounds = array<i64: 1, 128>}, {transform_indices = @transform_5, window_bounds = array<i64: 128, 128>}]} {
    %c0 = arith.constant 0 : index
    %c0_0 = arith.constant 0 : index
    %0 = vector.load %arg1[%c0, %c0_0] : memref<1x128xf32, #tpu.memory_space<vmem>>, vector<1x128xf32>
    %1 = vector.shape_cast %0 : vector<1x128xf32> to vector<128xf32>
    %2 = vector.shape_cast %1 : vector<128xf32> to vector<128x1xf32>
    %c0_1 = arith.constant 0 : index
    %c0_2 = arith.constant 0 : index
    %3 = vector.load %arg2[%c0_1, %c0_2] : memref<1x128xf32, #tpu.memory_space<vmem>>, vector<1x128xf32>
    %4 = vector.shape_cast %3 : vector<1x128xf32> to vector<128xf32>
    %5 = vector.shape_cast %4 : vector<128xf32> to vector<128x1xf32>
    %c0_3 = arith.constant 0 : index
    %c0_4 = arith.constant 0 : index
    %6 = vector.load %arg3[%c0_3, %c0_4] : memref<1x128xf32, #tpu.memory_space<vmem>>, vector<1x128xf32>
    %7 = vector.broadcast %2 : vector<128x1xf32> to vector<128x128xf32>
    %8 = vector.broadcast %6 : vector<1x128xf32> to vector<128x128xf32>
    %9 = arith.mulf %7, %8 : vector<128x128xf32>
    %c0_5 = arith.constant 0 : index
    %c0_6 = arith.constant 0 : index
    %10 = vector.load %arg4[%c0_5, %c0_6] : memref<1x128xf32, #tpu.memory_space<vmem>>, vector<1x128xf32>
    %11 = vector.broadcast %5 : vector<128x1xf32> to vector<128x128xf32>
    %12 = vector.broadcast %10 : vector<1x128xf32> to vector<128x128xf32>
    %13 = arith.mulf %11, %12 : vector<128x128xf32>
    %14 = arith.addf %9, %13 : vector<128x128xf32>
    %c0_7 = arith.constant 0 : index
    %c0_8 = arith.constant 0 : index
    %15 = vector.load %arg5[%c0_7, %c0_8] : memref<1x128xf32, #tpu.memory_space<vmem>>, vector<1x128xf32>
    %16 = vector.broadcast %15 : vector<1x128xf32> to vector<128x128xf32>
    %17 = arith.addf %14, %16 : vector<128x128xf32>
    %18 = math.sin %17 : vector<128x128xf32>
    %c0_9 = arith.constant 0 : index
    %c0_10 = arith.constant 0 : index
    %19 = vector.load %arg6[%c0_9, %c0_10] : memref<128x128xf32, #tpu.memory_space<vmem>>, vector<128x128xf32>
    tpu.vector_store %arg6[%c0_9, %c0_10], %18 {strides = array<i32>} : memref<128x128xf32, #tpu.memory_space<vmem>>, vector<128x128xf32>,
    return
  }
  func.func @transform_0(%arg0: i32) -> (i32, i32) {
    %c0_i32 = arith.constant 0 : i32
    %c0_i32_0 = arith.constant 0 : i32
    return %c0_i32, %arg0 : i32, i32
  }
  func.func @transform_1(%arg0: i32) -> (i32, i32) {
    %c0_i32 = arith.constant 0 : i32
    %c0_i32_0 = arith.constant 0 : i32
    return %c0_i32, %arg0 : i32, i32
  }
  func.func @transform_2(%arg0: i32) -> (i32, i32) {
    %c0_i32 = arith.constant 0 : i32
    %c0_i32_0 = arith.constant 0 : i32
    %c0_i32_1 = arith.constant 0 : i32
    return %c0_i32, %c0_i32_0 : i32, i32
  }
  func.func @transform_3(%arg0: i32) -> (i32, i32) {
    %c0_i32 = arith.constant 0 : i32
    %c0_i32_0 = arith.constant 0 : i32
    %c0_i32_1 = arith.constant 0 : i32
    return %c0_i32, %c0_i32_0 : i32, i32
  }
  func.func @transform_4(%arg0: i32) -> (i32, i32) {
    %c0_i32 = arith.constant 0 : i32
    %c0_i32_0 = arith.constant 0 : i32
    %c0_i32_1 = arith.constant 0 : i32
    return %c0_i32, %c0_i32_0 : i32, i32
  }
  func.func @transform_5(%arg0: i32) -> (i32, i32) {
    %c0_i32 = arith.constant 0 : i32
    %c0_i32_0 = arith.constant 0 : i32
    return %arg0, %c0_i32 : i32, i32
  }
}

</mosaic_0001>

<llo_original>
// kernel: tpu_custom_call.1
$region0: #{tpu_custom_call.1}
  #allocation0 [shape = 'u32[]', space=smem, size = 0x4, offset = 0x4, fixed_abs, tag = 'smem constant byte address 0x4 - core index']
  #allocation1 [shape = 'u32[144,128]{1,0:T(1,128)}', space=vmem, size = 0x12000, scoped, tag = 'internal scratch']
  %s0 = inlined_call_operand.hbm [shape: f32[1,512], index: 0, kind: input, shape index: {}]
  %s1 = inlined_call_operand.hbm [shape: f32[1,512], index: 1, kind: input, shape index: {}]
  %s2 = inlined_call_operand.vmem [shape: f32[1,128], index: 2, kind: input, shape index: {}]
  %s3 = inlined_call_operand.vmem [shape: f32[1,128], index: 3, kind: input, shape index: {}]
  %s4 = inlined_call_operand.vmem [shape: f32[1,128], index: 4, kind: input, shape index: {}]
  %s5 = inlined_call_operand.hbm [shape: f32[512,128], index: 5, kind: output, shape index: {}]
  %s6 = sld [smem:[#allocation0]]
  $region61: #{tpu_custom_call.1} parent=0
    _
  %s8 = ssub.s32 1, %s6
  %s9 = scalar_select 0, %s8, %s6
  $region1: #{tpu_custom_call.1} parent=0
    #allocation2 [shape = 'u8[1024]{0}', space=vmem, size = 0x400, scoped, tag = 'input window, operand 0']
    #allocation3 [shape = 's32[2]{0}', space=sflag, size = 0x8, scoped, tag = 'scoped memory for tpu_custom_call.1']
    #allocation4 [shape = 's32[2]{0}', space=sflag, size = 0x8, scoped, tag = 'scoped memory for tpu_custom_call.1']
    #allocation5 [shape = 'u8[1024]{0}', space=vmem, size = 0x400, scoped, tag = 'input window, operand 1']
    #allocation6 [shape = 's32[2]{0}', space=sflag, size = 0x8, scoped, tag = 'scoped memory for tpu_custom_call.1']
    #allocation7 [shape = 'u8[131072]{0}', space=vmem, size = 0x20000, scoped, tag = 'output window, operand 0']
    %10 = vsyncpa [#allocation3], 0
    %s11 = scalar_lea.sflag [#allocation3], 1
    %12 = vsyncpa %s11, 0
    %13 = vsyncpa [#allocation6], 0
    %s14 = scalar_lea.sflag [#allocation6], 1
    %15 = vsyncpa %s14, 0
    %16 = vsyncpa [#allocation4], 0
    %s17 = scalar_lea.sflag [#allocation4], 1
    %18 = vsyncpa %s17, 0
    loop: start=0, step=1, limit=6
    $region2: #{tpu_custom_call.1} parent=1 // loop_pre_header
      _
    $region3: #{tpu_custom_call.1} parent=1 // loop_header
      %s20 = sphi 0, %s24
      %p21 = scmp.ge.s32.totalorder %s20, 6
      %s30 = sphi 0, %s32
      %s33 = sphi 0, %s30
      %s34 = sphi 0, %s33
      %s50 = sphi 0, %s34
      %s56 = sphi 0, %s58
      %s59 = sphi 0, %s56
      %s60 = sphi 0, %s59
      %s76 = sphi 0, %s60
      %s80 = sphi 0, %s80
      %s82 = sphi 0, %s80
      %s83 = sphi 0, %s82
      %s97 = sphi 0, %s83
      %s101 = sphi 0, %s101
      %s103 = sphi 0, %s101
      %s104 = sphi 0, %s103
      %s118 = sphi 0, %s104
      %s122 = sphi 0, %s122
      %s124 = sphi 0, %s122
      %s125 = sphi 0, %s124
      %s139 = sphi 0, %s125
      %s145 = sphi 0, %s147
      %s148 = sphi 0, %s145
      %s149 = sphi 0, %s148
      %s165 = sphi 0, %s149
    $region4: #{tpu_custom_call.1} parent=1 // loop_header_branch
      %23 = sbr.rel (%p21) target = $region8
    $region5: #{tpu_custom_call.1} parent=1 // loop_body
      %s25 = ssub.s32 %s20, 1
      %s26 = ssub.s32 %s20, 2
      %s27 = sadd.s32 %s20, 1
      %s28 = ssub.s32 %s20, %s27
      %p29 = scmp.eq.s32.totalorder %s28, 0
      %s31 = sadd.s32 %s30, 1
      %s32 = scalar_select %p29, %s30, %s31
      %p35 = pneg %p29
      %p36 = scmp.eq.s32.totalorder %s20, 3
      %p37 = por %p35, %p36
      %p38 = scmp.ne.s32.totalorder %s30, %s33
      %p39 = scmp.eq.s32.totalorder %s20, 0
      %p40 = por %p38, %p39
      %p41 = scmp.ne.s32.totalorder %s30, %s33
      %p42 = scmp.eq.s32.totalorder %s25, 3
      %p43 = por %p41, %p42
      %p44 = scmp.ne.s32.totalorder %s33, %s34
      %p45 = scmp.eq.s32.totalorder %s25, 0
      %p46 = por %p44, %p45
      %p47 = scmp.ne.s32.totalorder %s33, %s34
      %p48 = scmp.eq.s32.totalorder %s26, 3
      %p49 = por %p47, %p48
      %p51 = scmp.ne.s32.totalorder %s34, %s50
      %p52 = scmp.eq.s32.totalorder %s26, 0
      %p53 = por %p51, %p52
      %s54 = ssub.s32 %s20, %s27
      %p55 = scmp.eq.s32.totalorder %s54, 0
      %s57 = sadd.s32 %s56, 1
      %s58 = scalar_select %p55, %s56, %s57
      %p61 = pneg %p55
      %p62 = scmp.eq.s32.totalorder %s20, 3
      %p63 = por %p61, %p62
      %p64 = scmp.ne.s32.totalorder %s56, %s59
      %p65 = scmp.eq.s32.totalorder %s20, 0
      %p66 = por %p64, %p65
      %p67 = scmp.ne.s32.totalorder %s56, %s59
      %p68 = scmp.eq.s32.totalorder %s25, 3
      %p69 = por %p67, %p68
      %p70 = scmp.ne.s32.totalorder %s59, %s60
      %p71 = scmp.eq.s32.totalorder %s25, 0
      %p72 = por %p70, %p71
      %p73 = scmp.ne.s32.totalorder %s59, %s60
      %p74 = scmp.eq.s32.totalorder %s26, 3
      %p75 = por %p73, %p74
      %p77 = scmp.ne.s32.totalorder %s60, %s76
      %p78 = scmp.eq.s32.totalorder %s26, 0
      %p79 = por %p77, %p78
      %s81 = sadd.s32 %s80, 1
      %p84 = scmp.eq.s32.totalorder %s20, 3
      %p85 = scmp.ne.s32.totalorder %s80, %s82
      %p86 = scmp.eq.s32.totalorder %s20, 0
      %p87 = por %p85, %p86
      %p88 = scmp.ne.s32.totalorder %s80, %s82
      %p89 = scmp.eq.s32.totalorder %s25, 3
      %p90 = por %p88, %p89
      %p91 = scmp.ne.s32.totalorder %s82, %s83
      %p92 = scmp.eq.s32.totalorder %s25, 0
      %p93 = por %p91, %p92
      %p94 = scmp.ne.s32.totalorder %s82, %s83
      %p95 = scmp.eq.s32.totalorder %s26, 3
      %p96 = por %p94, %p95
      %p98 = scmp.ne.s32.totalorder %s83, %s97
      %p99 = scmp.eq.s32.totalorder %s26, 0
      %p100 = por %p98, %p99
      %s102 = sadd.s32 %s101, 1
      %p105 = scmp.eq.s32.totalorder %s20, 3
      %p106 = scmp.ne.s32.totalorder %s101, %s103
      %p107 = scmp.eq.s32.totalorder %s20, 0
      %p108 = por %p106, %p107
      %p109 = scmp.ne.s32.totalorder %s101, %s103
      %p110 = scmp.eq.s32.totalorder %s25, 3
      %p111 = por %p109, %p110
      %p112 = scmp.ne.s32.totalorder %s103, %s104
      %p113 = scmp.eq.s32.totalorder %s25, 0
      %p114 = por %p112, %p113
      %p115 = scmp.ne.s32.totalorder %s103, %s104
      %p116 = scmp.eq.s32.totalorder %s26, 3
      %p117 = por %p115, %p116
      %p119 = scmp.ne.s32.totalorder %s104, %s118
      %p120 = scmp.eq.s32.totalorder %s26, 0
      %p121 = por %p119, %p120
      %s123 = sadd.s32 %s122, 1
      %p126 = scmp.eq.s32.totalorder %s20, 3
      %p127 = scmp.ne.s32.totalorder %s122, %s124
      %p128 = scmp.eq.s32.totalorder %s20, 0
      %p129 = por %p127, %p128
      %p130 = scmp.ne.s32.totalorder %s122, %s124
      %p131 = scmp.eq.s32.totalorder %s25, 3
      %p132 = por %p130, %p131
      %p133 = scmp.ne.s32.totalorder %s124, %s125
      %p134 = scmp.eq.s32.totalorder %s25, 0
      %p135 = por %p133, %p134
      %p136 = scmp.ne.s32.totalorder %s124, %s125
      %p137 = scmp.eq.s32.totalorder %s26, 3
      %p138 = por %p136, %p137
      %p140 = scmp.ne.s32.totalorder %s125, %s139
      %p141 = scmp.eq.s32.totalorder %s26, 0
      %p142 = por %p140, %p141
      %s143 = ssub.s32 %s20, %s27
      %p144 = scmp.eq.s32.totalorder %s143, 0
      %s146 = sadd.s32 %s145, 1
      %s147 = scalar_select %p144, %s145, %s146
      %p150 = pneg %p144
      %p151 = scmp.eq.s32.totalorder %s20, 3
      %p152 = por %p150, %p151
      %p153 = scmp.ne.s32.totalorder %s145, %s148
      %p154 = scmp.eq.s32.totalorder %s20, 0
      %p155 = por %p153, %p154
      %p156 = scmp.ne.s32.totalorder %s145, %s148
      %p157 = scmp.eq.s32.totalorder %s25, 3
      %p158 = por %p156, %p157
      %p159 = scmp.ne.s32.totalorder %s148, %s149
      %p160 = scmp.eq.s32.totalorder %s25, 0
      %p161 = por %p159, %p160
      %p162 = scmp.ne.s32.totalorder %s148, %s149
      %p163 = scmp.eq.s32.totalorder %s26, 3
      %p164 = por %p162, %p163
      %p166 = scmp.ne.s32.totalorder %s149, %s165
      %p167 = scmp.eq.s32.totalorder %s26, 0
      %p168 = por %p166, %p167
      %p169 = scmp.le.s32.totalorder 1, %s20
      %p170 = scmp.lt.s32.totalorder %s20, 5
      %p171 = pnand %p169, %p170
      %p172 = pneg %p171
      // Predicated region
      $region9: #{tpu_custom_call.1} parent=5 // pred_check
        _
      $region10: #{tpu_custom_call.1} parent=5 // pred_check_branch
        %174 = sbr.rel (%p171) target = $region12
      $region11: #{tpu_custom_call.1} parent=5 // pred_region
        %s175 = ssub.s32 %s20, 1
        // Predicated region
        $region13: #{tpu_custom_call.1} parent=11 // pred_check
          %p176 = pneg %p93
        $region14: #{tpu_custom_call.1} parent=11 // pred_check_branch
          %178 = sbr.rel (%p176) target = $region16
        $region15: #{tpu_custom_call.1} parent=11 // pred_region
          _
        $region16: #{tpu_custom_call.1} parent=11 // pred_fallthru
          _
        // Predicated region
        $region17: #{tpu_custom_call.1} parent=11 // pred_check
          %p179 = pneg %p114
        $region18: #{tpu_custom_call.1} parent=11 // pred_check_branch
          %181 = sbr.rel (%p179) target = $region20
        $region19: #{tpu_custom_call.1} parent=11 // pred_region
          _
        $region20: #{tpu_custom_call.1} parent=11 // pred_fallthru
          _
        // Predicated region
        $region21: #{tpu_custom_call.1} parent=11 // pred_check
          %p182 = pneg %p135
        $region22: #{tpu_custom_call.1} parent=11 // pred_check_branch
          %184 = sbr.rel (%p182) target = $region24
        $region23: #{tpu_custom_call.1} parent=11 // pred_region
          _
        $region24: #{tpu_custom_call.1} parent=11 // pred_fallthru
          _
      $region12: #{tpu_custom_call.1} parent=5 // pred_fallthru
        _
      %p185 = scmp.lt.s32.totalorder %s20, 4
      // Predicated region
      $region25: #{tpu_custom_call.1} parent=5 // pred_check
        %p186 = pneg %p185
      $region26: #{tpu_custom_call.1} parent=5 // pred_check_branch
        %188 = sbr.rel (%p186) target = $region28
      $region27: #{tpu_custom_call.1} parent=5 // pred_region
        // Predicated region
        $region29: #{tpu_custom_call.1} parent=27 // pred_check
          %p189 = pneg %p40
        $region30: #{tpu_custom_call.1} parent=27 // pred_check_branch
          %191 = sbr.rel (%p189) target = $region32
        $region31: #{tpu_custom_call.1} parent=27 // pred_region
          %s192 = sand.u32 %s30, 1
          %s193 = scalar_lea.sflag [#allocation3], %s192
          %s194 = sand.u32 %s30, 1
          %s195 = scalar_lea.vmem [#allocation2], %s194
          %s197 = ssub.s32 16, 16
          %198 = vsyncadd %s193, %s197
          %s199 = smul.addr %s20, 16
          %s200 = scalar_lea.hbm %s0, %s199
          %s202 = sshll.u32 %s195, 4
          %s203 = int_to_ptr.vmem [resolvable:$true] %s202
          %205 = dma.hbm_to_vmem [thread:$0]  %s200, 16, %s203, %s193
        $region32: #{tpu_custom_call.1} parent=27 // pred_fallthru
          _
        // Predicated region
        $region33: #{tpu_custom_call.1} parent=27 // pred_check
          %p206 = pneg %p66
        $region34: #{tpu_custom_call.1} parent=27 // pred_check_branch
          %208 = sbr.rel (%p206) target = $region36
        $region35: #{tpu_custom_call.1} parent=27 // pred_region
          %s209 = sand.u32 %s56, 1
          %s210 = scalar_lea.sflag [#allocation6], %s209
          %s211 = sand.u32 %s56, 1
          %s212 = scalar_lea.vmem [#allocation5], %s211
          %s214 = ssub.s32 16, 16
          %215 = vsyncadd %s210, %s214
          %s216 = smul.addr %s20, 16
          %s217 = scalar_lea.hbm %s1, %s216
          %s219 = sshll.u32 %s212, 4
          %s220 = int_to_ptr.vmem [resolvable:$true] %s219
          %222 = dma.hbm_to_vmem [thread:$0]  %s217, 16, %s220, %s210
        $region36: #{tpu_custom_call.1} parent=27 // pred_fallthru
          _
      $region28: #{tpu_custom_call.1} parent=5 // pred_fallthru
        _
      %p223 = scmp.le.s32.totalorder 1, %s20
      %p224 = scmp.lt.s32.totalorder %s20, 5
      %p225 = pnand %p223, %p224
      %p226 = pneg %p225
      // Predicated region
      $region37: #{tpu_custom_call.1} parent=5 // pred_check
        _
      $region38: #{tpu_custom_call.1} parent=5 // pred_check_branch
        %228 = sbr.rel (%p225) target = $region40
      $region39: #{tpu_custom_call.1} parent=5 // pred_region
        %s229 = ssub.s32 %s20, 1
        %s230 = sand.u32 %s33, 1
        %s231 = scalar_lea.sflag [#allocation3], %s230
        %s232 = sand.u32 %s33, 1
        %s233 = scalar_lea.vmem [#allocation2], %s232
        // Predicated region
        $region41: #{tpu_custom_call.1} parent=39 // pred_check
          %p234 = pneg %p46
        $region42: #{tpu_custom_call.1} parent=39 // pred_check_branch
          %236 = sbr.rel (%p234) target = $region44
        $region43: #{tpu_custom_call.1} parent=39 // pred_region
          %237 = dma.done %s231, 16
        $region44: #{tpu_custom_call.1} parent=39 // pred_fallthru
          _
        %s238 = sand.u32 %s59, 1
        %s239 = scalar_lea.sflag [#allocation6], %s238
        %s240 = sand.u32 %s59, 1
        %s241 = scalar_lea.vmem [#allocation5], %s240
        // Predicated region
        $region45: #{tpu_custom_call.1} parent=39 // pred_check
          %p242 = pneg %p72
        $region46: #{tpu_custom_call.1} parent=39 // pred_check_branch
          %244 = sbr.rel (%p242) target = $region48
        $region47: #{tpu_custom_call.1} parent=39 // pred_region
          %245 = dma.done %s239, 16
        $region48: #{tpu_custom_call.1} parent=39 // pred_fallthru
          _
        %s246 = sand.u32 %s33, 1
        %s247 = scalar_lea.sflag [#allocation3], %s246
        %s248 = sand.u32 %s33, 1
        %s249 = scalar_lea.vmem [#allocation2], %s248
        %p250 = pneg %p46
        %p251 = pneg %p43
        %s252 = sand.u32 %s59, 1
        %s253 = scalar_lea.sflag [#allocation6], %s252
        %s254 = sand.u32 %s59, 1
        %s255 = scalar_lea.vmem [#allocation5], %s254
        %p256 = pneg %p72
        %p257 = pneg %p69
        %p258 = pneg %p93
        %p259 = pneg %p90
        %p260 = pneg %p114
        %p261 = pneg %p111
        %p262 = pneg %p135
        %p263 = pneg %p132
        %p264 = pneg %p161
        %p265 = pneg %p158
        %s266 = sand.u32 %s148, 1
        %s267 = scalar_lea.sflag [#allocation4], %s266
        %s268 = sand.u32 %s148, 1
        %s269 = smul.addr %s268, 128
        %s270 = scalar_lea.vmem [#allocation7], %s269
        %s271 = smul.u32 16, %s25
        %v272 = vld [vmem:[%s233] sm:$0x1]
        %v273 = vlaneseq
        %v274 = vshrl.u32 %v273, 7
        %v275 = vsub.s32 0, %v274
        %v276 = vrot.slane %v272, %v275
        %278 = vbcast.lane.b32.xlu0 %v276, 256
        %v279 = vpop.permute.xlu0 %278
        %s281 = sor.u32 256, 8
        %282 = vbcast.lane.b32.xlu0 %v276, %s281
        %v283 = vpop.permute.xlu0 %282
        %s285 = sor.u32 256, 16
        %286 = vbcast.lane.b32.xlu0 %v276, %s285
        %v287 = vpop.permute.xlu0 %286
        %s289 = sor.u32 256, 24
        %290 = vbcast.lane.b32.xlu0 %v276, %s289
        %v291 = vpop.permute.xlu0 %290
        %s293 = sor.u32 256, 32
        %294 = vbcast.lane.b32.xlu0 %v276, %s293
        %v295 = vpop.permute.xlu0 %294
        %s297 = sor.u32 256, 40
        %298 = vbcast.lane.b32.xlu0 %v276, %s297
        %v299 = vpop.permute.xlu0 %298
        %s301 = sor.u32 256, 48
        %302 = vbcast.lane.b32.xlu0 %v276, %s301
        %v303 = vpop.permute.xlu0 %302
        %s305 = sor.u32 256, 56
        %306 = vbcast.lane.b32.xlu0 %v276, %s305
        %v307 = vpop.permute.xlu0 %306
        %s309 = sor.u32 256, 64
        %310 = vbcast.lane.b32.xlu0 %v276, %s309
        %v311 = vpop.permute.xlu0 %310
        %s313 = sor.u32 256, 72
        %314 = vbcast.lane.b32.xlu0 %v276, %s313
        %v315 = vpop.permute.xlu0 %314
        %s317 = sor.u32 256, 80
        %318 = vbcast.lane.b32.xlu0 %v276, %s317
        %v319 = vpop.permute.xlu0 %318
        %s321 = sor.u32 256, 88
        %322 = vbcast.lane.b32.xlu0 %v276, %s321
        %v323 = vpop.permute.xlu0 %322
        %s325 = sor.u32 256, 96
        %326 = vbcast.lane.b32.xlu0 %v276, %s325
        %v327 = vpop.permute.xlu0 %326
        %s329 = sor.u32 256, 104
        %330 = vbcast.lane.b32.xlu0 %v276, %s329
        %v331 = vpop.permute.xlu0 %330
        %s333 = sor.u32 256, 112
        %334 = vbcast.lane.b32.xlu0 %v276, %s333
        %v335 = vpop.permute.xlu0 %334
        %s337 = sor.u32 256, 120
        %338 = vbcast.lane.b32.xlu0 %v276, %s337
        %v339 = vpop.permute.xlu0 %338
        %v340 = vld [vmem:[%s241] sm:$0x1]
        %v341 = vlaneseq
        %v342 = vshrl.u32 %v341, 7
        %v343 = vsub.s32 0, %v342
        %v344 = vrot.slane %v340, %v343
        %346 = vbcast.lane.b32.xlu0 %v344, 256
        %v347 = vpop.permute.xlu0 %346
        %s349 = sor.u32 256, 8
        %350 = vbcast.lane.b32.xlu0 %v344, %s349
        %v351 = vpop.permute.xlu0 %350
        %s353 = sor.u32 256, 16
        %354 = vbcast.lane.b32.xlu0 %v344, %s353
        %v355 = vpop.permute.xlu0 %354
        %s357 = sor.u32 256, 24
        %358 = vbcast.lane.b32.xlu0 %v344, %s357
        %v359 = vpop.permute.xlu0 %358
        %s361 = sor.u32 256, 32
        %362 = vbcast.lane.b32.xlu0 %v344, %s361
        %v363 = vpop.permute.xlu0 %362
        %s365 = sor.u32 256, 40
        %366 = vbcast.lane.b32.xlu0 %v344, %s365
        %v367 = vpop.permute.xlu0 %366
        %s369 = sor.u32 256, 48
        %370 = vbcast.lane.b32.xlu0 %v344, %s369
        %v371 = vpop.permute.xlu0 %370
        %s373 = sor.u32 256, 56
        %374 = vbcast.lane.b32.xlu0 %v344, %s373
        %v375 = vpop.permute.xlu0 %374
        %s377 = sor.u32 256, 64
        %378 = vbcast.lane.b32.xlu0 %v344, %s377
        %v379 = vpop.permute.xlu0 %378
        %s381 = sor.u32 256, 72
        %382 = vbcast.lane.b32.xlu0 %v344, %s381
        %v383 = vpop.permute.xlu0 %382
        %s385 = sor.u32 256, 80
        %386 = vbcast.lane.b32.xlu0 %v344, %s385
        %v387 = vpop.permute.xlu0 %386
        %s389 = sor.u32 256, 88
        %390 = vbcast.lane.b32.xlu0 %v344, %s389
        %v391 = vpop.permute.xlu0 %390
        %s393 = sor.u32 256, 96
        %394 = vbcast.lane.b32.xlu0 %v344, %s393
        %v395 = vpop.permute.xlu0 %394
        %s397 = sor.u32 256, 104
        %398 = vbcast.lane.b32.xlu0 %v344, %s397
        %v399 = vpop.permute.xlu0 %398
        %s401 = sor.u32 256, 112
        %402 = vbcast.lane.b32.xlu0 %v344, %s401
        %v403 = vpop.permute.xlu0 %402
        %s405 = sor.u32 256, 120
        %406 = vbcast.lane.b32.xlu0 %v344, %s405
        %v407 = vpop.permute.xlu0 %406
        %v408 = vld [vmem:[%s2] sm:$0x1]
        %v410 = vlaneseq
        %v411 = vshrl.u32 %v410, 7
        %v412 = vsub.s32 0, %v411
        %v413 = vrot.slane %v408, %v412
        %v415 = vmul.f32 %v279, %v413
        %v416 = vmul.f32 %v283, %v413
        %v417 = vmul.f32 %v287, %v413
        %v418 = vmul.f32 %v291, %v413
        %v419 = vmul.f32 %v295, %v413
        %v420 = vmul.f32 %v299, %v413
        %v421 = vmul.f32 %v303, %v413
        %v422 = vmul.f32 %v307, %v413
        %v423 = vmul.f32 %v311, %v413
        %v424 = vmul.f32 %v315, %v413
        %v425 = vmul.f32 %v319, %v413
        %v426 = vmul.f32 %v323, %v413
        %v427 = vmul.f32 %v327, %v413
        %v428 = vmul.f32 %v331, %v413
        %v429 = vmul.f32 %v335, %v413
        %v430 = vmul.f32 %v339, %v413
        %v431 = vld [vmem:[%s3] sm:$0x1]
        %v433 = vlaneseq
        %v434 = vshrl.u32 %v433, 7
        %v435 = vsub.s32 0, %v434
        %v436 = vrot.slane %v431, %v435
        %v438 = vmul.f32 %v347, %v436
        %v439 = vmul.f32 %v351, %v436
        %v440 = vmul.f32 %v355, %v436
        %v441 = vmul.f32 %v359, %v436
        %v442 = vmul.f32 %v363, %v436
        %v443 = vmul.f32 %v367, %v436
        %v444 = vmul.f32 %v371, %v436
        %v445 = vmul.f32 %v375, %v436
        %v446 = vmul.f32 %v379, %v436
        %v447 = vmul.f32 %v383, %v436
        %v448 = vmul.f32 %v387, %v436
        %v449 = vmul.f32 %v391, %v436
        %v450 = vmul.f32 %v395, %v436
        %v451 = vmul.f32 %v399, %v436
        %v452 = vmul.f32 %v403, %v436
        %v453 = vmul.f32 %v407, %v436
        %v454 = vadd.f32 %v415, %v438
        %v455 = vadd.f32 %v416, %v439
        %v456 = vadd.f32 %v417, %v440
        %v457 = vadd.f32 %v418, %v441
        %v458 = vadd.f32 %v419, %v442
        %v459 = vadd.f32 %v420, %v443
        %v460 = vadd.f32 %v421, %v444
        %v461 = vadd.f32 %v422, %v445
        %v462 = vadd.f32 %v423, %v446
        %v463 = vadd.f32 %v424, %v447
        %v464 = vadd.f32 %v425, %v448
        %v465 = vadd.f32 %v426, %v449
        %v466 = vadd.f32 %v427, %v450
        %v467 = vadd.f32 %v428, %v451
        %v468 = vadd.f32 %v429, %v452
        %v469 = vadd.f32 %v430, %v453
        %v470 = vld [vmem:[%s4] sm:$0x1]
        %v472 = vlaneseq
        %v473 = vshrl.u32 %v472, 7
        %v474 = vsub.s32 0, %v473
        %v475 = vrot.slane %v470, %v474
        %v477 = vadd.f32 %v454, %v475
        %v478 = vadd.f32 %v455, %v475
        %v479 = vadd.f32 %v456, %v475
        %v480 = vadd.f32 %v457, %v475
        %v481 = vadd.f32 %v458, %v475
        %v482 = vadd.f32 %v459, %v475
        %v483 = vadd.f32 %v460, %v475
        %v484 = vadd.f32 %v461, %v475
        %v485 = vadd.f32 %v462, %v475
        %v486 = vadd.f32 %v463, %v475
        %v487 = vadd.f32 %v464, %v475
        %v488 = vadd.f32 %v465, %v475
        %v489 = vadd.f32 %v466, %v475
        %v490 = vadd.f32 %v467, %v475
        %v491 = vadd.f32 %v468, %v475
        %v492 = vadd.f32 %v469, %v475
        %v493 = vand.u32 2147483647, %v477
        %vm494 = vcmp.le.f32.partialorder %v493, 0.7853982
        %vm495 = vcmp.lt.s32.totalorder %v477, 0
        %v496 = vand.u32 %v477, 2139095040
        %v497 = vshrl.u32 %v496, 23
        %v498 = vsub.s32 %v497, 127
        %v499 = vand.u32 2147483647, %v477
        %v500 = vand.u32 %v499, 8388607
        %v501 = vor.u32 %v500, 8388608
        %v502 = vsub.s32 0, %v501
        %v503 = vadd.s32 %v498, 1
        %vm504 = vcmp.gt.s32.totalorder %v503, 0
        %v505 = vsel %vm504, %v503, 0
        %v506 = vshrl.u32 %v505, 5
        %v507 = vand.u32 %v505, 31
        %v508 = vsub.s32 32, %v507
        %v509 = vshrl.u32 683565275, %v508
        %v510 = vshll.u32 683565275, %v507
        %v511 = vshrl.u32 2475754826, %v508
        %v512 = vor.u32 %v510, %v511
        %v513 = vshll.u32 2475754826, %v507
        %v514 = vshrl.u32 2131351028, %v508
        %v515 = vor.u32 %v513, %v514
        %v516 = vshll.u32 2131351028, %v507
        %v517 = vshrl.u32 2102212464, %v508
        %v518 = vor.u32 %v516, %v517
        %v519 = vshll.u32 2102212464, %v507
        %v520 = vshrl.u32 920167782, %v508
        %v521 = vor.u32 %v519, %v520
        %v522 = vshll.u32 920167782, %v507
        %v523 = vshrl.u32 1326507024, %v508
        %v524 = vor.u32 %v522, %v523
        %vm525 = vcmp.lt.s32.totalorder %v506, 1
        %vm526 = vcmp.lt.s32.totalorder %v506, 2
        %vm527 = vcmp.lt.s32.totalorder %v506, 3
        %vm528 = vcmp.lt.s32.totalorder %v506, 4
        %v529 = vsel %vm525, %v509, %v512
        %v530 = vsel %vm528, %v518, 2102212464
        %v531 = vsel %vm527, %v515, %v530
        %v532 = vsel %vm526, %v529, %v531
        %v533 = vsel %vm525, %v512, %v515
        %v534 = vsel %vm528, %v521, 920167782
        %v535 = vsel %vm527, %v518, %v534
        %v536 = vsel %vm526, %v533, %v535
        %v537 = vsel %vm525, %v515, %v518
        %v538 = vsel %vm528, %v524, 1326507024
        %v539 = vsel %vm527, %v521, %v538
        %v540 = vsel %vm526, %v537, %v539
        %v541 = vshll.u32 %v501, 8
        %v542 = vmul.u32.u64.compose %v541, %v540
        %v543 = vextract.low.u32 %v542
        %v544 = vextract.high.u32 %v542
        %v545 = vmul.u32.u64.compose %v541, %v536
        %v546 = vextract.low.u32 %v545
        %v547 = vextract.high.u32 %v545
        %v548 = vmul.u32 %v541, %v532
        %v549 = vadd.s32 %v544, %v546
        %vm550 = vc.u32 %v544, %v546
        %v551 = vadd.s32 %v547, 1
        %v552 = vsel %vm550, %v551, %v547
        %v553 = vadd.s32 %v548, %v552
        %v554 = vadd.s32 %v553, 536870912
        %v555 = vshrl.u32 %v554, 30
        %v556 = vshll.u32 %v555, 30
        %v557 = vsub.s32 %v553, %v556
        %vm558 = vcmp.lt.s32.totalorder %v557, 0
        %v559 = vsub.s32 0, %v557
        %v560 = vsel %vm558, %v559, %v557
        %v561 = vclz %v560
        %v562 = vsub.s32 %v561, 2
        %vm563 = vcmp.gt.s32.totalorder 0, %v562
        %v564 = vsel %vm563, 0, %v562
        %v565 = vsub.s32 32, %v564
        %v566 = vshll.u32 %v557, %v564
        %v567 = vshrl.u32 %v549, %v565
        %v568 = vor.u32 %v566, %v567
        %v569 = vsub.s32 4294967266, %v564
        %v570 = vadd.s32 %v569, 127
        %v571 = vshll.u32 %v570, 23
        %v572 = vor.u32 4788187, %v571
        %v573 = vand.u32 2147483647, %v572
        %v575 = vcvt.s32.f32 %v568
        %v576 = vmul.f32 %v575, %v573
        %v577 = vxor.u32 %v576, 2147483648
        %v578 = vsel %vm495, %v577, %v576
        %v579 = vsub.s32 4, %v555
        %v580 = vsel %vm495, %v579, %v555
        %v581 = vsel %vm494, %v477, %v578
        %v582 = vsel %vm494, 0, %v580
        %v583 = vcosq.f32.pop %v581
        %v584 = vsinq.f32.pop %v581
        %vm585 = vweird.f32 %v477
        %v586 = vadd.s32 %v582, 3
        %v587 = vand.u32 %v586, 3
        %vm588 = vcmp.lt.s32.totalorder %v587, 2
        %vm589 = vcmp.eq.s32.totalorder %v587, 0
        %v590 = vxor.u32 %v584, 2147483648
        %v591 = vsel %vm589, %v583, %v590
        %vm592 = vcmp.eq.s32.totalorder %v587, 2
        %v593 = vxor.u32 %v583, 2147483648
        %v594 = vsel %vm592, %v593, %v584
        %v595 = vsel %vm588, %v591, %v594
        %v596 = vsel %vm585, nan, %v595
        %v597 = vand.u32 2147483647, %v478
        %vm598 = vcmp.le.f32.partialorder %v597, 0.7853982
        %vm599 = vcmp.lt.s32.totalorder %v478, 0
        %v600 = vand.u32 %v478, 2139095040
        %v601 = vshrl.u32 %v600, 23
        %v602 = vsub.s32 %v601, 127
        %v603 = vand.u32 2147483647, %v478
        %v604 = vand.u32 %v603, 8388607
        %v605 = vor.u32 %v604, 8388608
        %v606 = vsub.s32 0, %v605
        %v607 = vadd.s32 %v602, 1
        %vm608 = vcmp.gt.s32.totalorder %v607, 0
        %v609 = vsel %vm608, %v607, 0
        %v610 = vshrl.u32 %v609, 5
        %v611 = vand.u32 %v609, 31
        %v612 = vsub.s32 32, %v611
        %v613 = vshrl.u32 683565275, %v612
        %v614 = vshll.u32 683565275, %v611
        %v615 = vshrl.u32 2475754826, %v612
        %v616 = vor.u32 %v614, %v615
        %v617 = vshll.u32 2475754826, %v611
        %v618 = vshrl.u32 2131351028, %v612
        %v619 = vor.u32 %v617, %v618
        %v620 = vshll.u32 2131351028, %v611
        %v621 = vshrl.u32 2102212464, %v612
        %v622 = vor.u32 %v620, %v621
        %v623 = vshll.u32 2102212464, %v611
        %v624 = vshrl.u32 920167782, %v612
        %v625 = vor.u32 %v623, %v624
        %v626 = vshll.u32 920167782, %v611
        %v627 = vshrl.u32 1326507024, %v612
        %v628 = vor.u32 %v626, %v627
        %vm629 = vcmp.lt.s32.totalorder %v610, 1
        %vm630 = vcmp.lt.s32.totalorder %v610, 2
        %vm631 = vcmp.lt.s32.totalorder %v610, 3
        %vm632 = vcmp.lt.s32.totalorder %v610, 4
        %v633 = vsel %vm629, %v613, %v616
        %v634 = vsel %vm632, %v622, 2102212464
        %v635 = vsel %vm631, %v619, %v634
        %v636 = vsel %vm630, %v633, %v635
        %v637 = vsel %vm629, %v616, %v619
        %v638 = vsel %vm632, %v625, 920167782
        %v639 = vsel %vm631, %v622, %v638
        %v640 = vsel %vm630, %v637, %v639
        %v641 = vsel %vm629, %v619, %v622
        %v642 = vsel %vm632, %v628, 1326507024
        %v643 = vsel %vm631, %v625, %v642
        %v644 = vsel %vm630, %v641, %v643
        %v645 = vshll.u32 %v605, 8
        %v646 = vmul.u32.u64.compose %v645, %v644
        %v647 = vextract.low.u32 %v646
        %v648 = vextract.high.u32 %v646
        %v649 = vmul.u32.u64.compose %v645, %v640
        %v650 = vextract.low.u32 %v649
        %v651 = vextract.high.u32 %v649
        %v652 = vmul.u32 %v645, %v636
        %v653 = vadd.s32 %v648, %v650
        %vm654 = vc.u32 %v648, %v650
        %v655 = vadd.s32 %v651, 1
        %v656 = vsel %vm654, %v655, %v651
        %v657 = vadd.s32 %v652, %v656
        %v658 = vadd.s32 %v657, 536870912
        %v659 = vshrl.u32 %v658, 30
        %v660 = vshll.u32 %v659, 30
        %v661 = vsub.s32 %v657, %v660
        %vm662 = vcmp.lt.s32.totalorder %v661, 0
        %v663 = vsub.s32 0, %v661
        %v664 = vsel %vm662, %v663, %v661
        %v665 = vclz %v664
        %v666 = vsub.s32 %v665, 2
        %vm667 = vcmp.gt.s32.totalorder 0, %v666
        %v668 = vsel %vm667, 0, %v666
        %v669 = vsub.s32 32, %v668
        %v670 = vshll.u32 %v661, %v668
        %v671 = vshrl.u32 %v653, %v669
        %v672 = vor.u32 %v670, %v671
        %v673 = vsub.s32 4294967266, %v668
        %v674 = vadd.s32 %v673, 127
        %v675 = vshll.u32 %v674, 23
        %v676 = vor.u32 4788187, %v675
        %v677 = vand.u32 2147483647, %v676
        %v679 = vcvt.s32.f32 %v672
        %v680 = vmul.f32 %v679, %v677
        %v681 = vxor.u32 %v680, 2147483648
        %v682 = vsel %vm599, %v681, %v680
        %v683 = vsub.s32 4, %v659
        %v684 = vsel %vm599, %v683, %v659
        %v685 = vsel %vm598, %v478, %v682
        %v686 = vsel %vm598, 0, %v684
        %v687 = vcosq.f32.pop %v685
        %v688 = vsinq.f32.pop %v685
        %vm689 = vweird.f32 %v478
        %v690 = vadd.s32 %v686, 3
        %v691 = vand.u32 %v690, 3
        %vm692 = vcmp.lt.s32.totalorder %v691, 2
        %vm693 = vcmp.eq.s32.totalorder %v691, 0
        %v694 = vxor.u32 %v688, 2147483648
        %v695 = vsel %vm693, %v687, %v694
        %vm696 = vcmp.eq.s32.totalorder %v691, 2
        %v697 = vxor.u32 %v687, 2147483648
        %v698 = vsel %vm696, %v697, %v688
        %v699 = vsel %vm692, %v695, %v698
        %v700 = vsel %vm689, nan, %v699
        %v701 = vand.u32 2147483647, %v479
        %vm702 = vcmp.le.f32.partialorder %v701, 0.7853982
        %vm703 = vcmp.lt.s32.totalorder %v479, 0
        %v704 = vand.u32 %v479, 2139095040
        %v705 = vshrl.u32 %v704, 23
        %v706 = vsub.s32 %v705, 127
        %v707 = vand.u32 2147483647, %v479
        %v708 = vand.u32 %v707, 8388607
        %v709 = vor.u32 %v708, 8388608
        %v710 = vsub.s32 0, %v709
        %v711 = vadd.s32 %v706, 1
        %vm712 = vcmp.gt.s32.totalorder %v711, 0
        %v713 = vsel %vm712, %v711, 0
        %v714 = vshrl.u32 %v713, 5
        %v715 = vand.u32 %v713, 31
        %v716 = vsub.s32 32, %v715
        %v717 = vshrl.u32 683565275, %v716
        %v718 = vshll.u32 683565275, %v715
        %v719 = vshrl.u32 2475754826, %v716
        %v720 = vor.u32 %v718, %v719
        %v721 = vshll.u32 2475754826, %v715
        %v722 = vshrl.u32 2131351028, %v716
        %v723 = vor.u32 %v721, %v722
        %v724 = vshll.u32 2131351028, %v715
        %v725 = vshrl.u32 2102212464, %v716
        %v726 = vor.u32 %v724, %v725
        %v727 = vshll.u32 2102212464, %v715
        %v728 = vshrl.u32 920167782, %v716
        %v729 = vor.u32 %v727, %v728
        %v730 = vshll.u32 920167782, %v715
        %v731 = vshrl.u32 1326507024, %v716
        %v732 = vor.u32 %v730, %v731
        %vm733 = vcmp.lt.s32.totalorder %v714, 1
        %vm734 = vcmp.lt.s32.totalorder %v714, 2
        %vm735 = vcmp.lt.s32.totalorder %v714, 3
        %vm736 = vcmp.lt.s32.totalorder %v714, 4
        %v737 = vsel %vm733, %v717, %v720
        %v738 = vsel %vm736, %v726, 2102212464
        %v739 = vsel %vm735, %v723, %v738
        %v740 = vsel %vm734, %v737, %v739
        %v741 = vsel %vm733, %v720, %v723
        %v742 = vsel %vm736, %v729, 920167782
        %v743 = vsel %vm735, %v726, %v742
        %v744 = vsel %vm734, %v741, %v743
        %v745 = vsel %vm733, %v723, %v726
        %v746 = vsel %vm736, %v732, 1326507024
        %v747 = vsel %vm735, %v729, %v746
        %v748 = vsel %vm734, %v745, %v747
        %v749 = vshll.u32 %v709, 8
        %v750 = vmul.u32.u64.compose %v749, %v748
        %v751 = vextract.low.u32 %v750
        %v752 = vextract.high.u32 %v750
        %v753 = vmul.u32.u64.compose %v749, %v744
        %v754 = vextract.low.u32 %v753
        %v755 = vextract.high.u32 %v753
        %v756 = vmul.u32 %v749, %v740
        %v757 = vadd.s32 %v752, %v754
        %vm758 = vc.u32 %v752, %v754
        %v759 = vadd.s32 %v755, 1
        %v760 = vsel %vm758, %v759, %v755
        %v761 = vadd.s32 %v756, %v760
        %v762 = vadd.s32 %v761, 536870912
        %v763 = vshrl.u32 %v762, 30
        %v764 = vshll.u32 %v763, 30
        %v765 = vsub.s32 %v761, %v764
        %vm766 = vcmp.lt.s32.totalorder %v765, 0
        %v767 = vsub.s32 0, %v765
        %v768 = vsel %vm766, %v767, %v765
        %v769 = vclz %v768
        %v770 = vsub.s32 %v769, 2
        %vm771 = vcmp.gt.s32.totalorder 0, %v770
        %v772 = vsel %vm771, 0, %v770
        %v773 = vsub.s32 32, %v772
        %v774 = vshll.u32 %v765, %v772
        %v775 = vshrl.u32 %v757, %v773
        %v776 = vor.u32 %v774, %v775
        %v777 = vsub.s32 4294967266, %v772
        %v778 = vadd.s32 %v777, 127
        %v779 = vshll.u32 %v778, 23
        %v780 = vor.u32 4788187, %v779
        %v781 = vand.u32 2147483647, %v780
        %v783 = vcvt.s32.f32 %v776
        %v784 = vmul.f32 %v783, %v781
        %v785 = vxor.u32 %v784, 2147483648
        %v786 = vsel %vm703, %v785, %v784
        %v787 = vsub.s32 4, %v763
        %v788 = vsel %vm703, %v787, %v763
        %v789 = vsel %vm702, %v479, %v786
        %v790 = vsel %vm702, 0, %v788
        %v791 = vcosq.f32.pop %v789
        %v792 = vsinq.f32.pop %v789
        %vm793 = vweird.f32 %v479
        %v794 = vadd.s32 %v790, 3
        %v795 = vand.u32 %v794, 3
        %vm796 = vcmp.lt.s32.totalorder %v795, 2
        %vm797 = vcmp.eq.s32.totalorder %v795, 0
        %v798 = vxor.u32 %v792, 2147483648
        %v799 = vsel %vm797, %v791, %v798
        %vm800 = vcmp.eq.s32.totalorder %v795, 2
        %v801 = vxor.u32 %v791, 2147483648
        %v802 = vsel %vm800, %v801, %v792
        %v803 = vsel %vm796, %v799, %v802
        %v804 = vsel %vm793, nan, %v803
        %v805 = vand.u32 2147483647, %v480
        %vm806 = vcmp.le.f32.partialorder %v805, 0.7853982
        %vm807 = vcmp.lt.s32.totalorder %v480, 0
        %v808 = vand.u32 %v480, 2139095040
        %v809 = vshrl.u32 %v808, 23
        %v810 = vsub.s32 %v809, 127
        %v811 = vand.u32 2147483647, %v480
        %v812 = vand.u32 %v811, 8388607
        %v813 = vor.u32 %v812, 8388608
        %v814 = vsub.s32 0, %v813
        %v815 = vadd.s32 %v810, 1
        %vm816 = vcmp.gt.s32.totalorder %v815, 0
        %v817 = vsel %vm816, %v815, 0
        %v818 = vshrl.u32 %v817, 5
        %v819 = vand.u32 %v817, 31
        %v820 = vsub.s32 32, %v819
        %v821 = vshrl.u32 683565275, %v820
        %v822 = vshll.u32 683565275, %v819
        %v823 = vshrl.u32 2475754826, %v820
        %v824 = vor.u32 %v822, %v823
        %v825 = vshll.u32 2475754826, %v819
        %v826 = vshrl.u32 2131351028, %v820
        %v827 = vor.u32 %v825, %v826
        %v828 = vshll.u32 2131351028, %v819
        %v829 = vshrl.u32 2102212464, %v820
        %v830 = vor.u32 %v828, %v829
        %v831 = vshll.u32 2102212464, %v819
        %v832 = vshrl.u32 920167782, %v820
        %v833 = vor.u32 %v831, %v832
        %v834 = vshll.u32 920167782, %v819
        %v835 = vshrl.u32 1326507024, %v820
        %v836 = vor.u32 %v834, %v835
        %vm837 = vcmp.lt.s32.totalorder %v818, 1
        %vm838 = vcmp.lt.s32.totalorder %v818, 2
        %vm839 = vcmp.lt.s32.totalorder %v818, 3
        %vm840 = vcmp.lt.s32.totalorder %v818, 4
        %v841 = vsel %vm837, %v821, %v824
        %v842 = vsel %vm840, %v830, 2102212464
        %v843 = vsel %vm839, %v827, %v842
        %v844 = vsel %vm838, %v841, %v843
        %v845 = vsel %vm837, %v824, %v827
        %v846 = vsel %vm840, %v833, 920167782
        %v847 = vsel %vm839, %v830, %v846
        %v848 = vsel %vm838, %v845, %v847
        %v849 = vsel %vm837, %v827, %v830
        %v850 = vsel %vm840, %v836, 1326507024
        %v851 = vsel %vm839, %v833, %v850
        %v852 = vsel %vm838, %v849, %v851
        %v853 = vshll.u32 %v813, 8
        %v854 = vmul.u32.u64.compose %v853, %v852
        %v855 = vextract.low.u32 %v854
        %v856 = vextract.high.u32 %v854
        %v857 = vmul.u32.u64.compose %v853, %v848
        %v858 = vextract.low.u32 %v857
        %v859 = vextract.high.u32 %v857
        %v860 = vmul.u32 %v853, %v844
        %v861 = vadd.s32 %v856, %v858
        %vm862 = vc.u32 %v856, %v858
        %v863 = vadd.s32 %v859, 1
        %v864 = vsel %vm862, %v863, %v859
        %v865 = vadd.s32 %v860, %v864
        %v866 = vadd.s32 %v865, 536870912
        %v867 = vshrl.u32 %v866, 30
        %v868 = vshll.u32 %v867, 30
        %v869 = vsub.s32 %v865, %v868
        %vm870 = vcmp.lt.s32.totalorder %v869, 0
        %v871 = vsub.s32 0, %v869
        %v872 = vsel %vm870, %v871, %v869
        %v873 = vclz %v872
        %v874 = vsub.s32 %v873, 2
        %vm875 = vcmp.gt.s32.totalorder 0, %v874
        %v876 = vsel %vm875, 0, %v874
        %v877 = vsub.s32 32, %v876
        %v878 = vshll.u32 %v869, %v876
        %v879 = vshrl.u32 %v861, %v877
        %v880 = vor.u32 %v878, %v879
        %v881 = vsub.s32 4294967266, %v876
        %v882 = vadd.s32 %v881, 127
        %v883 = vshll.u32 %v882, 23
        %v884 = vor.u32 4788187, %v883
        %v885 = vand.u32 2147483647, %v884
        %v887 = vcvt.s32.f32 %v880
        %v888 = vmul.f32 %v887, %v885
        %v889 = vxor.u32 %v888, 2147483648
        %v890 = vsel %vm807, %v889, %v888
        %v891 = vsub.s32 4, %v867
        %v892 = vsel %vm807, %v891, %v867
        %v893 = vsel %vm806, %v480, %v890
        %v894 = vsel %vm806, 0, %v892
        %v895 = vcosq.f32.pop %v893
        %v896 = vsinq.f32.pop %v893
        %vm897 = vweird.f32 %v480
        %v898 = vadd.s32 %v894, 3
        %v899 = vand.u32 %v898, 3
        %vm900 = vcmp.lt.s32.totalorder %v899, 2
        %vm901 = vcmp.eq.s32.totalorder %v899, 0
        %v902 = vxor.u32 %v896, 2147483648
        %v903 = vsel %vm901, %v895, %v902
        %vm904 = vcmp.eq.s32.totalorder %v899, 2
        %v905 = vxor.u32 %v895, 2147483648
        %v906 = vsel %vm904, %v905, %v896
        %v907 = vsel %vm900, %v903, %v906
        %v908 = vsel %vm897, nan, %v907
        %v909 = vand.u32 2147483647, %v481
        %vm910 = vcmp.le.f32.partialorder %v909, 0.7853982
        %vm911 = vcmp.lt.s32.totalorder %v481, 0
        %v912 = vand.u32 %v481, 2139095040
        %v913 = vshrl.u32 %v912, 23
        %v914 = vsub.s32 %v913, 127
        %v915 = vand.u32 2147483647, %v481
        %v916 = vand.u32 %v915, 8388607
        %v917 = vor.u32 %v916, 8388608
        %v918 = vsub.s32 0, %v917
        %v919 = vadd.s32 %v914, 1
        %vm920 = vcmp.gt.s32.totalorder %v919, 0
        %v921 = vsel %vm920, %v919, 0
        %v922 = vshrl.u32 %v921, 5
        %v923 = vand.u32 %v921, 31
        %v924 = vsub.s32 32, %v923
        %v925 = vshrl.u32 683565275, %v924
        %v926 = vshll.u32 683565275, %v923
        %v927 = vshrl.u32 2475754826, %v924
        %v928 = vor.u32 %v926, %v927
        %v929 = vshll.u32 2475754826, %v923
        %v930 = vshrl.u32 2131351028, %v924
        %v931 = vor.u32 %v929, %v930
        %v932 = vshll.u32 2131351028, %v923
        %v933 = vshrl.u32 2102212464, %v924
        %v934 = vor.u32 %v932, %v933
        %v935 = vshll.u32 2102212464, %v923
        %v936 = vshrl.u32 920167782, %v924
        %v937 = vor.u32 %v935, %v936
        %v938 = vshll.u32 920167782, %v923
        %v939 = vshrl.u32 1326507024, %v924
        %v940 = vor.u32 %v938, %v939
        %vm941 = vcmp.lt.s32.totalorder %v922, 1
        %vm942 = vcmp.lt.s32.totalorder %v922, 2
        %vm943 = vcmp.lt.s32.totalorder %v922, 3
        %vm944 = vcmp.lt.s32.totalorder %v922, 4
        %v945 = vsel %vm941, %v925, %v928
        %v946 = vsel %vm944, %v934, 2102212464
        %v947 = vsel %vm943, %v931, %v946
        %v948 = vsel %vm942, %v945, %v947
        %v949 = vsel %vm941, %v928, %v931
        %v950 = vsel %vm944, %v937, 920167782
        %v951 = vsel %vm943, %v934, %v950
        %v952 = vsel %vm942, %v949, %v951
        %v953 = vsel %vm941, %v931, %v934
        %v954 = vsel %vm944, %v940, 1326507024
        %v955 = vsel %vm943, %v937, %v954
        %v956 = vsel %vm942, %v953, %v955
        %v957 = vshll.u32 %v917, 8
        %v958 = vmul.u32.u64.compose %v957, %v956
        %v959 = vextract.low.u32 %v958
        %v960 = vextract.high.u32 %v958
        %v961 = vmul.u32.u64.compose %v957, %v952
        %v962 = vextract.low.u32 %v961
        %v963 = vextract.high.u32 %v961
        %v964 = vmul.u32 %v957, %v948
        %v965 = vadd.s32 %v960, %v962
        %vm966 = vc.u32 %v960, %v962
        %v967 = vadd.s32 %v963, 1
        %v968 = vsel %vm966, %v967, %v963
        %v969 = vadd.s32 %v964, %v968
        %v970 = vadd.s32 %v969, 536870912
        %v971 = vshrl.u32 %v970, 30
        %v972 = vshll.u32 %v971, 30
        %v973 = vsub.s32 %v969, %v972
        %vm974 = vcmp.lt.s32.totalorder %v973, 0
        %v975 = vsub.s32 0, %v973
        %v976 = vsel %vm974, %v975, %v973
        %v977 = vclz %v976
        %v978 = vsub.s32 %v977, 2
        %vm979 = vcmp.gt.s32.totalorder 0, %v978
        %v980 = vsel %vm979, 0, %v978
        %v981 = vsub.s32 32, %v980
        %v982 = vshll.u32 %v973, %v980
        %v983 = vshrl.u32 %v965, %v981
        %v984 = vor.u32 %v982, %v983
        %v985 = vsub.s32 4294967266, %v980
        %v986 = vadd.s32 %v985, 127
        %v987 = vshll.u32 %v986, 23
        %v988 = vor.u32 4788187, %v987
        %v989 = vand.u32 2147483647, %v988
        %v991 = vcvt.s32.f32 %v984
        %v992 = vmul.f32 %v991, %v989
        %v993 = vxor.u32 %v992, 2147483648
        %v994 = vsel %vm911, %v993, %v992
        %v995 = vsub.s32 4, %v971
        %v996 = vsel %vm911, %v995, %v971
        %v997 = vsel %vm910, %v481, %v994
        %v998 = vsel %vm910, 0, %v996
        %v999 = vcosq.f32.pop %v997
        %v1000 = vsinq.f32.pop %v997
        %vm1001 = vweird.f32 %v481
        %v1002 = vadd.s32 %v998, 3
        %v1003 = vand.u32 %v1002, 3
        %vm1004 = vcmp.lt.s32.totalorder %v1003, 2
        %vm1005 = vcmp.eq.s32.totalorder %v1003, 0
        %v1006 = vxor.u32 %v1000, 2147483648
        %v1007 = vsel %vm1005, %v999, %v1006
        %vm1008 = vcmp.eq.s32.totalorder %v1003, 2
        %v1009 = vxor.u32 %v999, 2147483648
        %v1010 = vsel %vm1008, %v1009, %v1000
        %v1011 = vsel %vm1004, %v1007, %v1010
        %v1012 = vsel %vm1001, nan, %v1011
        %v1013 = vand.u32 2147483647, %v482
        %vm1014 = vcmp.le.f32.partialorder %v1013, 0.7853982
        %vm1015 = vcmp.lt.s32.totalorder %v482, 0
        %v1016 = vand.u32 %v482, 2139095040
        %v1017 = vshrl.u32 %v1016, 23
        %v1018 = vsub.s32 %v1017, 127
        %v1019 = vand.u32 2147483647, %v482
        %v1020 = vand.u32 %v1019, 8388607
        %v1021 = vor.u32 %v1020, 8388608
        %v1022 = vsub.s32 0, %v1021
        %v1023 = vadd.s32 %v1018, 1
        %vm1024 = vcmp.gt.s32.totalorder %v1023, 0
        %v1025 = vsel %vm1024, %v1023, 0
        %v1026 = vshrl.u32 %v1025, 5
        %v1027 = vand.u32 %v1025, 31
        %v1028 = vsub.s32 32, %v1027
        %v1029 = vshrl.u32 683565275, %v1028
        %v1030 = vshll.u32 683565275, %v1027
        %v1031 = vshrl.u32 2475754826, %v1028
        %v1032 = vor.u32 %v1030, %v1031
        %v1033 = vshll.u32 2475754826, %v1027
        %v1034 = vshrl.u32 2131351028, %v1028
        %v1035 = vor.u32 %v1033, %v1034
        %v1036 = vshll.u32 2131351028, %v1027
        %v1037 = vshrl.u32 2102212464, %v1028
        %v1038 = vor.u32 %v1036, %v1037
        %v1039 = vshll.u32 2102212464, %v1027
        %v1040 = vshrl.u32 920167782, %v1028
        %v1041 = vor.u32 %v1039, %v1040
        %v1042 = vshll.u32 920167782, %v1027
        %v1043 = vshrl.u32 1326507024, %v1028
        %v1044 = vor.u32 %v1042, %v1043
        %vm1045 = vcmp.lt.s32.totalorder %v1026, 1
        %vm1046 = vcmp.lt.s32.totalorder %v1026, 2
        %vm1047 = vcmp.lt.s32.totalorder %v1026, 3
        %vm1048 = vcmp.lt.s32.totalorder %v1026, 4
        %v1049 = vsel %vm1045, %v1029, %v1032
        %v1050 = vsel %vm1048, %v1038, 2102212464
        %v1051 = vsel %vm1047, %v1035, %v1050
        %v1052 = vsel %vm1046, %v1049, %v1051
        %v1053 = vsel %vm1045, %v1032, %v1035
        %v1054 = vsel %vm1048, %v1041, 920167782
        %v1055 = vsel %vm1047, %v1038, %v1054
        %v1056 = vsel %vm1046, %v1053, %v1055
        %v1057 = vsel %vm1045, %v1035, %v1038
        %v1058 = vsel %vm1048, %v1044, 1326507024
        %v1059 = vsel %vm1047, %v1041, %v1058
        %v1060 = vsel %vm1046, %v1057, %v1059
        %v1061 = vshll.u32 %v1021, 8
        %v1062 = vmul.u32.u64.compose %v1061, %v1060
        %v1063 = vextract.low.u32 %v1062
        %v1064 = vextract.high.u32 %v1062
        %v1065 = vmul.u32.u64.compose %v1061, %v1056
        %v1066 = vextract.low.u32 %v1065
        %v1067 = vextract.high.u32 %v1065
        %v1068 = vmul.u32 %v1061, %v1052
        %v1069 = vadd.s32 %v1064, %v1066
        %vm1070 = vc.u32 %v1064, %v1066
        %v1071 = vadd.s32 %v1067, 1
        %v1072 = vsel %vm1070, %v1071, %v1067
        %v1073 = vadd.s32 %v1068, %v1072
        %v1074 = vadd.s32 %v1073, 536870912
        %v1075 = vshrl.u32 %v1074, 30
        %v1076 = vshll.u32 %v1075, 30
        %v1077 = vsub.s32 %v1073, %v1076
        %vm1078 = vcmp.lt.s32.totalorder %v1077, 0
        %v1079 = vsub.s32 0, %v1077
        %v1080 = vsel %vm1078, %v1079, %v1077
        %v1081 = vclz %v1080
        %v1082 = vsub.s32 %v1081, 2
        %vm1083 = vcmp.gt.s32.totalorder 0, %v1082
        %v1084 = vsel %vm1083, 0, %v1082
        %v1085 = vsub.s32 32, %v1084
        %v1086 = vshll.u32 %v1077, %v1084
        %v1087 = vshrl.u32 %v1069, %v1085
        %v1088 = vor.u32 %v1086, %v1087
        %v1089 = vsub.s32 4294967266, %v1084
        %v1090 = vadd.s32 %v1089, 127
        %v1091 = vshll.u32 %v1090, 23
        %v1092 = vor.u32 4788187, %v1091
        %v1093 = vand.u32 2147483647, %v1092
        %v1095 = vcvt.s32.f32 %v1088
        %v1096 = vmul.f32 %v1095, %v1093
        %v1097 = vxor.u32 %v1096, 2147483648
        %v1098 = vsel %vm1015, %v1097, %v1096
        %v1099 = vsub.s32 4, %v1075
        %v1100 = vsel %vm1015, %v1099, %v1075
        %v1101 = vsel %vm1014, %v482, %v1098
        %v1102 = vsel %vm1014, 0, %v1100
        %v1103 = vcosq.f32.pop %v1101
        %v1104 = vsinq.f32.pop %v1101
        %vm1105 = vweird.f32 %v482
        %v1106 = vadd.s32 %v1102, 3
        %v1107 = vand.u32 %v1106, 3
        %vm1108 = vcmp.lt.s32.totalorder %v1107, 2
        %vm1109 = vcmp.eq.s32.totalorder %v1107, 0
        %v1110 = vxor.u32 %v1104, 2147483648
        %v1111 = vsel %vm1109, %v1103, %v1110
        %vm1112 = vcmp.eq.s32.totalorder %v1107, 2
        %v1113 = vxor.u32 %v1103, 2147483648
        %v1114 = vsel %vm1112, %v1113, %v1104
        %v1115 = vsel %vm1108, %v1111, %v1114
        %v1116 = vsel %vm1105, nan, %v1115
        %v1117 = vand.u32 2147483647, %v483
        %vm1118 = vcmp.le.f32.partialorder %v1117, 0.7853982
        %vm1119 = vcmp.lt.s32.totalorder %v483, 0
        %v1120 = vand.u32 %v483, 2139095040
        %v1121 = vshrl.u32 %v1120, 23
        %v1122 = vsub.s32 %v1121, 127
        %v1123 = vand.u32 2147483647, %v483
        %v1124 = vand.u32 %v1123, 8388607
        %v1125 = vor.u32 %v1124, 8388608
        %v1126 = vsub.s32 0, %v1125
        %v1127 = vadd.s32 %v1122, 1
        %vm1128 = vcmp.gt.s32.totalorder %v1127, 0
        %v1129 = vsel %vm1128, %v1127, 0
        %v1130 = vshrl.u32 %v1129, 5
        %v1131 = vand.u32 %v1129, 31
        %v1132 = vsub.s32 32, %v1131
        %v1133 = vshrl.u32 683565275, %v1132
        %v1134 = vshll.u32 683565275, %v1131
        %v1135 = vshrl.u32 2475754826, %v1132
        %v1136 = vor.u32 %v1134, %v1135
        %v1137 = vshll.u32 2475754826, %v1131
        %v1138 = vshrl.u32 2131351028, %v1132
        %v1139 = vor.u32 %v1137, %v1138
        %v1140 = vshll.u32 2131351028, %v1131
        %v1141 = vshrl.u32 2102212464, %v1132
        %v1142 = vor.u32 %v1140, %v1141
        %v1143 = vshll.u32 2102212464, %v1131
        %v1144 = vshrl.u32 920167782, %v1132
        %v1145 = vor.u32 %v1143, %v1144
        %v1146 = vshll.u32 920167782, %v1131
        %v1147 = vshrl.u32 1326507024, %v1132
        %v1148 = vor.u32 %v1146, %v1147
        %vm1149 = vcmp.lt.s32.totalorder %v1130, 1
        %vm1150 = vcmp.lt.s32.totalorder %v1130, 2
        %vm1151 = vcmp.lt.s32.totalorder %v1130, 3
        %vm1152 = vcmp.lt.s32.totalorder %v1130, 4
        %v1153 = vsel %vm1149, %v1133, %v1136
        %v1154 = vsel %vm1152, %v1142, 2102212464
        %v1155 = vsel %vm1151, %v1139, %v1154
        %v1156 = vsel %vm1150, %v1153, %v1155
        %v1157 = vsel %vm1149, %v1136, %v1139
        %v1158 = vsel %vm1152, %v1145, 920167782
        %v1159 = vsel %vm1151, %v1142, %v1158
        %v1160 = vsel %vm1150, %v1157, %v1159
        %v1161 = vsel %vm1149, %v1139, %v1142
        %v1162 = vsel %vm1152, %v1148, 1326507024
        %v1163 = vsel %vm1151, %v1145, %v1162
        %v1164 = vsel %vm1150, %v1161, %v1163
        %v1165 = vshll.u32 %v1125, 8
        %v1166 = vmul.u32.u64.compose %v1165, %v1164
        %v1167 = vextract.low.u32 %v1166
        %v1168 = vextract.high.u32 %v1166
        %v1169 = vmul.u32.u64.compose %v1165, %v1160
        %v1170 = vextract.low.u32 %v1169
        %v1171 = vextract.high.u32 %v1169
        %v1172 = vmul.u32 %v1165, %v1156
        %v1173 = vadd.s32 %v1168, %v1170
        %vm1174 = vc.u32 %v1168, %v1170
        %v1175 = vadd.s32 %v1171, 1
        %v1176 = vsel %vm1174, %v1175, %v1171
        %v1177 = vadd.s32 %v1172, %v1176
        %v1178 = vadd.s32 %v1177, 536870912
        %v1179 = vshrl.u32 %v1178, 30
        %v1180 = vshll.u32 %v1179, 30
        %v1181 = vsub.s32 %v1177, %v1180
        %vm1182 = vcmp.lt.s32.totalorder %v1181, 0
        %v1183 = vsub.s32 0, %v1181
        %v1184 = vsel %vm1182, %v1183, %v1181
        %v1185 = vclz %v1184
        %v1186 = vsub.s32 %v1185, 2
        %vm1187 = vcmp.gt.s32.totalorder 0, %v1186
        %v1188 = vsel %vm1187, 0, %v1186
        %v1189 = vsub.s32 32, %v1188
        %v1190 = vshll.u32 %v1181, %v1188
        %v1191 = vshrl.u32 %v1173, %v1189
        %v1192 = vor.u32 %v1190, %v1191
        %v1193 = vsub.s32 4294967266, %v1188
        %v1194 = vadd.s32 %v1193, 127
        %v1195 = vshll.u32 %v1194, 23
        %v1196 = vor.u32 4788187, %v1195
        %v1197 = vand.u32 2147483647, %v1196
        %v1199 = vcvt.s32.f32 %v1192
        %v1200 = vmul.f32 %v1199, %v1197
        %v1201 = vxor.u32 %v1200, 2147483648
        %v1202 = vsel %vm1119, %v1201, %v1200
        %v1203 = vsub.s32 4, %v1179
        %v1204 = vsel %vm1119, %v1203, %v1179
        %v1205 = vsel %vm1118, %v483, %v1202
        %v1206 = vsel %vm1118, 0, %v1204
        %v1207 = vcosq.f32.pop %v1205
        %v1208 = vsinq.f32.pop %v1205
        %vm1209 = vweird.f32 %v483
        %v1210 = vadd.s32 %v1206, 3
        %v1211 = vand.u32 %v1210, 3
        %vm1212 = vcmp.lt.s32.totalorder %v1211, 2
        %vm1213 = vcmp.eq.s32.totalorder %v1211, 0
        %v1214 = vxor.u32 %v1208, 2147483648
        %v1215 = vsel %vm1213, %v1207, %v1214
        %vm1216 = vcmp.eq.s32.totalorder %v1211, 2
        %v1217 = vxor.u32 %v1207, 2147483648
        %v1218 = vsel %vm1216, %v1217, %v1208
        %v1219 = vsel %vm1212, %v1215, %v1218
        %v1220 = vsel %vm1209, nan, %v1219
        %v1221 = vand.u32 2147483647, %v484
        %vm1222 = vcmp.le.f32.partialorder %v1221, 0.7853982
        %vm1223 = vcmp.lt.s32.totalorder %v484, 0
        %v1224 = vand.u32 %v484, 2139095040
        %v1225 = vshrl.u32 %v1224, 23
        %v1226 = vsub.s32 %v1225, 127
        %v1227 = vand.u32 2147483647, %v484
        %v1228 = vand.u32 %v1227, 8388607
        %v1229 = vor.u32 %v1228, 8388608
        %v1230 = vsub.s32 0, %v1229
        %v1231 = vadd.s32 %v1226, 1
        %vm1232 = vcmp.gt.s32.totalorder %v1231, 0
        %v1233 = vsel %vm1232, %v1231, 0
        %v1234 = vshrl.u32 %v1233, 5
        %v1235 = vand.u32 %v1233, 31
        %v1236 = vsub.s32 32, %v1235
        %v1237 = vshrl.u32 683565275, %v1236
        %v1238 = vshll.u32 683565275, %v1235
        %v1239 = vshrl.u32 2475754826, %v1236
        %v1240 = vor.u32 %v1238, %v1239
        %v1241 = vshll.u32 2475754826, %v1235
        %v1242 = vshrl.u32 2131351028, %v1236
        %v1243 = vor.u32 %v1241, %v1242
        %v1244 = vshll.u32 2131351028, %v1235
        %v1245 = vshrl.u32 2102212464, %v1236
        %v1246 = vor.u32 %v1244, %v1245
        %v1247 = vshll.u32 2102212464, %v1235
        %v1248 = vshrl.u32 920167782, %v1236
        %v1249 = vor.u32 %v1247, %v1248
        %v1250 = vshll.u32 920167782, %v1235
        %v1251 = vshrl.u32 1326507024, %v1236
        %v1252 = vor.u32 %v1250, %v1251
        %vm1253 = vcmp.lt.s32.totalorder %v1234, 1
        %vm1254 = vcmp.lt.s32.totalorder %v1234, 2
        %vm1255 = vcmp.lt.s32.totalorder %v1234, 3
        %vm1256 = vcmp.lt.s32.totalorder %v1234, 4
        %v1257 = vsel %vm1253, %v1237, %v1240
        %v1258 = vsel %vm1256, %v1246, 2102212464
        %v1259 = vsel %vm1255, %v1243, %v1258
        %v1260 = vsel %vm1254, %v1257, %v1259
        %v1261 = vsel %vm1253, %v1240, %v1243
        %v1262 = vsel %vm1256, %v1249, 920167782
        %v1263 = vsel %vm1255, %v1246, %v1262
        %v1264 = vsel %vm1254, %v1261, %v1263
        %v1265 = vsel %vm1253, %v1243, %v1246
        %v1266 = vsel %vm1256, %v1252, 1326507024
        %v1267 = vsel %vm1255, %v1249, %v1266
        %v1268 = vsel %vm1254, %v1265, %v1267
        %v1269 = vshll.u32 %v1229, 8
        %v1270 = vmul.u32.u64.compose %v1269, %v1268
        %v1271 = vextract.low.u32 %v1270
        %v1272 = vextract.high.u32 %v1270
        %v1273 = vmul.u32.u64.compose %v1269, %v1264
        %v1274 = vextract.low.u32 %v1273
        %v1275 = vextract.high.u32 %v1273
        %v1276 = vmul.u32 %v1269, %v1260
        %v1277 = vadd.s32 %v1272, %v1274
        %vm1278 = vc.u32 %v1272, %v1274
        %v1279 = vadd.s32 %v1275, 1
        %v1280 = vsel %vm1278, %v1279, %v1275
        %v1281 = vadd.s32 %v1276, %v1280
        %v1282 = vadd.s32 %v1281, 536870912
        %v1283 = vshrl.u32 %v1282, 30
        %v1284 = vshll.u32 %v1283, 30
        %v1285 = vsub.s32 %v1281, %v1284
        %vm1286 = vcmp.lt.s32.totalorder %v1285, 0
        %v1287 = vsub.s32 0, %v1285
        %v1288 = vsel %vm1286, %v1287, %v1285
        %v1289 = vclz %v1288
        %v1290 = vsub.s32 %v1289, 2
        %vm1291 = vcmp.gt.s32.totalorder 0, %v1290
        %v1292 = vsel %vm1291, 0, %v1290
        %v1293 = vsub.s32 32, %v1292
        %v1294 = vshll.u32 %v1285, %v1292
        %v1295 = vshrl.u32 %v1277, %v1293
        %v1296 = vor.u32 %v1294, %v1295
        %v1297 = vsub.s32 4294967266, %v1292
        %v1298 = vadd.s32 %v1297, 127
        %v1299 = vshll.u32 %v1298, 23
        %v1300 = vor.u32 4788187, %v1299
        %v1301 = vand.u32 2147483647, %v1300
        %v1303 = vcvt.s32.f32 %v1296
        %v1304 = vmul.f32 %v1303, %v1301
        %v1305 = vxor.u32 %v1304, 2147483648
        %v1306 = vsel %vm1223, %v1305, %v1304
        %v1307 = vsub.s32 4, %v1283
        %v1308 = vsel %vm1223, %v1307, %v1283
        %v1309 = vsel %vm1222, %v484, %v1306
        %v1310 = vsel %vm1222, 0, %v1308
        %v1311 = vcosq.f32.pop %v1309
        %v1312 = vsinq.f32.pop %v1309
        %vm1313 = vweird.f32 %v484
        %v1314 = vadd.s32 %v1310, 3
        %v1315 = vand.u32 %v1314, 3
        %vm1316 = vcmp.lt.s32.totalorder %v1315, 2
        %vm1317 = vcmp.eq.s32.totalorder %v1315, 0
        %v1318 = vxor.u32 %v1312, 2147483648
        %v1319 = vsel %vm1317, %v1311, %v1318
        %vm1320 = vcmp.eq.s32.totalorder %v1315, 2
        %v1321 = vxor.u32 %v1311, 2147483648
        %v1322 = vsel %vm1320, %v1321, %v1312
        %v1323 = vsel %vm1316, %v1319, %v1322
        %v1324 = vsel %vm1313, nan, %v1323
        %v1325 = vand.u32 2147483647, %v485
        %vm1326 = vcmp.le.f32.partialorder %v1325, 0.7853982
        %vm1327 = vcmp.lt.s32.totalorder %v485, 0
        %v1328 = vand.u32 %v485, 2139095040
        %v1329 = vshrl.u32 %v1328, 23
        %v1330 = vsub.s32 %v1329, 127
        %v1331 = vand.u32 2147483647, %v485
        %v1332 = vand.u32 %v1331, 8388607
        %v1333 = vor.u32 %v1332, 8388608
        %v1334 = vsub.s32 0, %v1333
        %v1335 = vadd.s32 %v1330, 1
        %vm1336 = vcmp.gt.s32.totalorder %v1335, 0
        %v1337 = vsel %vm1336, %v1335, 0
        %v1338 = vshrl.u32 %v1337, 5
        %v1339 = vand.u32 %v1337, 31
        %v1340 = vsub.s32 32, %v1339
        %v1341 = vshrl.u32 683565275, %v1340
        %v1342 = vshll.u32 683565275, %v1339
        %v1343 = vshrl.u32 2475754826, %v1340
        %v1344 = vor.u32 %v1342, %v1343
        %v1345 = vshll.u32 2475754826, %v1339
        %v1346 = vshrl.u32 2131351028, %v1340
        %v1347 = vor.u32 %v1345, %v1346
        %v1348 = vshll.u32 2131351028, %v1339
        %v1349 = vshrl.u32 2102212464, %v1340
        %v1350 = vor.u32 %v1348, %v1349
        %v1351 = vshll.u32 2102212464, %v1339
        %v1352 = vshrl.u32 920167782, %v1340
        %v1353 = vor.u32 %v1351, %v1352
        %v1354 = vshll.u32 920167782, %v1339
        %v1355 = vshrl.u32 1326507024, %v1340
        %v1356 = vor.u32 %v1354, %v1355
        %vm1357 = vcmp.lt.s32.totalorder %v1338, 1
        %vm1358 = vcmp.lt.s32.totalorder %v1338, 2
        %vm1359 = vcmp.lt.s32.totalorder %v1338, 3
        %vm1360 = vcmp.lt.s32.totalorder %v1338, 4
        %v1361 = vsel %vm1357, %v1341, %v1344
        %v1362 = vsel %vm1360, %v1350, 2102212464
        %v1363 = vsel %vm1359, %v1347, %v1362
        %v1364 = vsel %vm1358, %v1361, %v1363
        %v1365 = vsel %vm1357, %v1344, %v1347
        %v1366 = vsel %vm1360, %v1353, 920167782
        %v1367 = vsel %vm1359, %v1350, %v1366
        %v1368 = vsel %vm1358, %v1365, %v1367
        %v1369 = vsel %vm1357, %v1347, %v1350
        %v1370 = vsel %vm1360, %v1356, 1326507024
        %v1371 = vsel %vm1359, %v1353, %v1370
        %v1372 = vsel %vm1358, %v1369, %v1371
        %v1373 = vshll.u32 %v1333, 8
        %v1374 = vmul.u32.u64.compose %v1373, %v1372
        %v1375 = vextract.low.u32 %v1374
        %v1376 = vextract.high.u32 %v1374
        %v1377 = vmul.u32.u64.compose %v1373, %v1368
        %v1378 = vextract.low.u32 %v1377
        %v1379 = vextract.high.u32 %v1377
        %v1380 = vmul.u32 %v1373, %v1364
        %v1381 = vadd.s32 %v1376, %v1378
        %vm1382 = vc.u32 %v1376, %v1378
        %v1383 = vadd.s32 %v1379, 1
        %v1384 = vsel %vm1382, %v1383, %v1379
        %v1385 = vadd.s32 %v1380, %v1384
        %v1386 = vadd.s32 %v1385, 536870912
        %v1387 = vshrl.u32 %v1386, 30
        %v1388 = vshll.u32 %v1387, 30
        %v1389 = vsub.s32 %v1385, %v1388
        %vm1390 = vcmp.lt.s32.totalorder %v1389, 0
        %v1391 = vsub.s32 0, %v1389
        %v1392 = vsel %vm1390, %v1391, %v1389
        %v1393 = vclz %v1392
        %v1394 = vsub.s32 %v1393, 2
        %vm1395 = vcmp.gt.s32.totalorder 0, %v1394
        %v1396 = vsel %vm1395, 0, %v1394
        %v1397 = vsub.s32 32, %v1396
        %v1398 = vshll.u32 %v1389, %v1396
        %v1399 = vshrl.u32 %v1381, %v1397
        %v1400 = vor.u32 %v1398, %v1399
        %v1401 = vsub.s32 4294967266, %v1396
        %v1402 = vadd.s32 %v1401, 127
        %v1403 = vshll.u32 %v1402, 23
        %v1404 = vor.u32 4788187, %v1403
        %v1405 = vand.u32 2147483647, %v1404
        %v1407 = vcvt.s32.f32 %v1400
        %v1408 = vmul.f32 %v1407, %v1405
        %v1409 = vxor.u32 %v1408, 2147483648
        %v1410 = vsel %vm1327, %v1409, %v1408
        %v1411 = vsub.s32 4, %v1387
        %v1412 = vsel %vm1327, %v1411, %v1387
        %v1413 = vsel %vm1326, %v485, %v1410
        %v1414 = vsel %vm1326, 0, %v1412
        %v1415 = vcosq.f32.pop %v1413
        %v1416 = vsinq.f32.pop %v1413
        %vm1417 = vweird.f32 %v485
        %v1418 = vadd.s32 %v1414, 3
        %v1419 = vand.u32 %v1418, 3
        %vm1420 = vcmp.lt.s32.totalorder %v1419, 2
        %vm1421 = vcmp.eq.s32.totalorder %v1419, 0
        %v1422 = vxor.u32 %v1416, 2147483648
        %v1423 = vsel %vm1421, %v1415, %v1422
        %vm1424 = vcmp.eq.s32.totalorder %v1419, 2
        %v1425 = vxor.u32 %v1415, 2147483648
        %v1426 = vsel %vm1424, %v1425, %v1416
        %v1427 = vsel %vm1420, %v1423, %v1426
        %v1428 = vsel %vm1417, nan, %v1427
        %v1429 = vand.u32 2147483647, %v486
        %vm1430 = vcmp.le.f32.partialorder %v1429, 0.7853982
        %vm1431 = vcmp.lt.s32.totalorder %v486, 0
        %v1432 = vand.u32 %v486, 2139095040
        %v1433 = vshrl.u32 %v1432, 23
        %v1434 = vsub.s32 %v1433, 127
        %v1435 = vand.u32 2147483647, %v486
        %v1436 = vand.u32 %v1435, 8388607
        %v1437 = vor.u32 %v1436, 8388608
        %v1438 = vsub.s32 0, %v1437
        %v1439 = vadd.s32 %v1434, 1
        %vm1440 = vcmp.gt.s32.totalorder %v1439, 0
        %v1441 = vsel %vm1440, %v1439, 0
        %v1442 = vshrl.u32 %v1441, 5
        %v1443 = vand.u32 %v1441, 31
        %v1444 = vsub.s32 32, %v1443
        %v1445 = vshrl.u32 683565275, %v1444
        %v1446 = vshll.u32 683565275, %v1443
        %v1447 = vshrl.u32 2475754826, %v1444
        %v1448 = vor.u32 %v1446, %v1447
        %v1449 = vshll.u32 2475754826, %v1443
        %v1450 = vshrl.u32 2131351028, %v1444
        %v1451 = vor.u32 %v1449, %v1450
        %v1452 = vshll.u32 2131351028, %v1443
        %v1453 = vshrl.u32 2102212464, %v1444
        %v1454 = vor.u32 %v1452, %v1453
        %v1455 = vshll.u32 2102212464, %v1443
        %v1456 = vshrl.u32 920167782, %v1444
        %v1457 = vor.u32 %v1455, %v1456
        %v1458 = vshll.u32 920167782, %v1443
        %v1459 = vshrl.u32 1326507024, %v1444
        %v1460 = vor.u32 %v1458, %v1459
        %vm1461 = vcmp.lt.s32.totalorder %v1442, 1
        %vm1462 = vcmp.lt.s32.totalorder %v1442, 2
        %vm1463 = vcmp.lt.s32.totalorder %v1442, 3
        %vm1464 = vcmp.lt.s32.totalorder %v1442, 4
        %v1465 = vsel %vm1461, %v1445, %v1448
        %v1466 = vsel %vm1464, %v1454, 2102212464
        %v1467 = vsel %vm1463, %v1451, %v1466
        %v1468 = vsel %vm1462, %v1465, %v1467
        %v1469 = vsel %vm1461, %v1448, %v1451
        %v1470 = vsel %vm1464, %v1457, 920167782
        %v1471 = vsel %vm1463, %v1454, %v1470
        %v1472 = vsel %vm1462, %v1469, %v1471
        %v1473 = vsel %vm1461, %v1451, %v1454
        %v1474 = vsel %vm1464, %v1460, 1326507024
        %v1475 = vsel %vm1463, %v1457, %v1474
        %v1476 = vsel %vm1462, %v1473, %v1475
        %v1477 = vshll.u32 %v1437, 8
        %v1478 = vmul.u32.u64.compose %v1477, %v1476
        %v1479 = vextract.low.u32 %v1478
        %v1480 = vextract.high.u32 %v1478
        %v1481 = vmul.u32.u64.compose %v1477, %v1472
        %v1482 = vextract.low.u32 %v1481
        %v1483 = vextract.high.u32 %v1481
        %v1484 = vmul.u32 %v1477, %v1468
        %v1485 = vadd.s32 %v1480, %v1482
        %vm1486 = vc.u32 %v1480, %v1482
        %v1487 = vadd.s32 %v1483, 1
        %v1488 = vsel %vm1486, %v1487, %v1483
        %v1489 = vadd.s32 %v1484, %v1488
        %v1490 = vadd.s32 %v1489, 536870912
        %v1491 = vshrl.u32 %v1490, 30
        %v1492 = vshll.u32 %v1491, 30
        %v1493 = vsub.s32 %v1489, %v1492
        %vm1494 = vcmp.lt.s32.totalorder %v1493, 0
        %v1495 = vsub.s32 0, %v1493
        %v1496 = vsel %vm1494, %v1495, %v1493
        %v1497 = vclz %v1496
        %v1498 = vsub.s32 %v1497, 2
        %vm1499 = vcmp.gt.s32.totalorder 0, %v1498
        %v1500 = vsel %vm1499, 0, %v1498
        %v1501 = vsub.s32 32, %v1500
        %v1502 = vshll.u32 %v1493, %v1500
        %v1503 = vshrl.u32 %v1485, %v1501
        %v1504 = vor.u32 %v1502, %v1503
        %v1505 = vsub.s32 4294967266, %v1500
        %v1506 = vadd.s32 %v1505, 127
        %v1507 = vshll.u32 %v1506, 23
        %v1508 = vor.u32 4788187, %v1507
        %v1509 = vand.u32 2147483647, %v1508
        %v1511 = vcvt.s32.f32 %v1504
        %v1512 = vmul.f32 %v1511, %v1509
        %v1513 = vxor.u32 %v1512, 2147483648
        %v1514 = vsel %vm1431, %v1513, %v1512
        %v1515 = vsub.s32 4, %v1491
        %v1516 = vsel %vm1431, %v1515, %v1491
        %v1517 = vsel %vm1430, %v486, %v1514
        %v1518 = vsel %vm1430, 0, %v1516
        %v1519 = vcosq.f32.pop %v1517
        %v1520 = vsinq.f32.pop %v1517
        %vm1521 = vweird.f32 %v486
        %v1522 = vadd.s32 %v1518, 3
        %v1523 = vand.u32 %v1522, 3
        %vm1524 = vcmp.lt.s32.totalorder %v1523, 2
        %vm1525 = vcmp.eq.s32.totalorder %v1523, 0
        %v1526 = vxor.u32 %v1520, 2147483648
        %v1527 = vsel %vm1525, %v1519, %v1526
        %vm1528 = vcmp.eq.s32.totalorder %v1523, 2
        %v1529 = vxor.u32 %v1519, 2147483648
        %v1530 = vsel %vm1528, %v1529, %v1520
        %v1531 = vsel %vm1524, %v1527, %v1530
        %v1532 = vsel %vm1521, nan, %v1531
        %v1533 = vand.u32 2147483647, %v487
        %vm1534 = vcmp.le.f32.partialorder %v1533, 0.7853982
        %vm1535 = vcmp.lt.s32.totalorder %v487, 0
        %v1536 = vand.u32 %v487, 2139095040
        %v1537 = vshrl.u32 %v1536, 23
        %v1538 = vsub.s32 %v1537, 127
        %v1539 = vand.u32 2147483647, %v487
        %v1540 = vand.u32 %v1539, 8388607
        %v1541 = vor.u32 %v1540, 8388608
        %v1542 = vsub.s32 0, %v1541
        %v1543 = vadd.s32 %v1538, 1
        %vm1544 = vcmp.gt.s32.totalorder %v1543, 0
        %v1545 = vsel %vm1544, %v1543, 0
        %v1546 = vshrl.u32 %v1545, 5
        %v1547 = vand.u32 %v1545, 31
        %v1548 = vsub.s32 32, %v1547
        %v1549 = vshrl.u32 683565275, %v1548
        %v1550 = vshll.u32 683565275, %v1547
        %v1551 = vshrl.u32 2475754826, %v1548
        %v1552 = vor.u32 %v1550, %v1551
        %v1553 = vshll.u32 2475754826, %v1547
        %v1554 = vshrl.u32 2131351028, %v1548
        %v1555 = vor.u32 %v1553, %v1554
        %v1556 = vshll.u32 2131351028, %v1547
        %v1557 = vshrl.u32 2102212464, %v1548
        %v1558 = vor.u32 %v1556, %v1557
        %v1559 = vshll.u32 2102212464, %v1547
        %v1560 = vshrl.u32 920167782, %v1548
        %v1561 = vor.u32 %v1559, %v1560
        %v1562 = vshll.u32 920167782, %v1547
        %v1563 = vshrl.u32 1326507024, %v1548
        %v1564 = vor.u32 %v1562, %v1563
        %vm1565 = vcmp.lt.s32.totalorder %v1546, 1
        %vm1566 = vcmp.lt.s32.totalorder %v1546, 2
        %vm1567 = vcmp.lt.s32.totalorder %v1546, 3
        %vm1568 = vcmp.lt.s32.totalorder %v1546, 4
        %v1569 = vsel %vm1565, %v1549, %v1552
        %v1570 = vsel %vm1568, %v1558, 2102212464
        %v1571 = vsel %vm1567, %v1555, %v1570
        %v1572 = vsel %vm1566, %v1569, %v1571
        %v1573 = vsel %vm1565, %v1552, %v1555
        %v1574 = vsel %vm1568, %v1561, 920167782
        %v1575 = vsel %vm1567, %v1558, %v1574
        %v1576 = vsel %vm1566, %v1573, %v1575
        %v1577 = vsel %vm1565, %v1555, %v1558
        %v1578 = vsel %vm1568, %v1564, 1326507024
        %v1579 = vsel %vm1567, %v1561, %v1578
        %v1580 = vsel %vm1566, %v1577, %v1579
        %v1581 = vshll.u32 %v1541, 8
        %v1582 = vmul.u32.u64.compose %v1581, %v1580
        %v1583 = vextract.low.u32 %v1582
        %v1584 = vextract.high.u32 %v1582
        %v1585 = vmul.u32.u64.compose %v1581, %v1576
        %v1586 = vextract.low.u32 %v1585
        %v1587 = vextract.high.u32 %v1585
        %v1588 = vmul.u32 %v1581, %v1572
        %v1589 = vadd.s32 %v1584, %v1586
        %vm1590 = vc.u32 %v1584, %v1586
        %v1591 = vadd.s32 %v1587, 1
        %v1592 = vsel %vm1590, %v1591, %v1587
        %v1593 = vadd.s32 %v1588, %v1592
        %v1594 = vadd.s32 %v1593, 536870912
        %v1595 = vshrl.u32 %v1594, 30
        %v1596 = vshll.u32 %v1595, 30
        %v1597 = vsub.s32 %v1593, %v1596
        %vm1598 = vcmp.lt.s32.totalorder %v1597, 0
        %v1599 = vsub.s32 0, %v1597
        %v1600 = vsel %vm1598, %v1599, %v1597
        %v1601 = vclz %v1600
        %v1602 = vsub.s32 %v1601, 2
        %vm1603 = vcmp.gt.s32.totalorder 0, %v1602
        %v1604 = vsel %vm1603, 0, %v1602
        %v1605 = vsub.s32 32, %v1604
        %v1606 = vshll.u32 %v1597, %v1604
        %v1607 = vshrl.u32 %v1589, %v1605
        %v1608 = vor.u32 %v1606, %v1607
        %v1609 = vsub.s32 4294967266, %v1604
        %v1610 = vadd.s32 %v1609, 127
        %v1611 = vshll.u32 %v1610, 23
        %v1612 = vor.u32 4788187, %v1611
        %v1613 = vand.u32 2147483647, %v1612
        %v1615 = vcvt.s32.f32 %v1608
        %v1616 = vmul.f32 %v1615, %v1613
        %v1617 = vxor.u32 %v1616, 2147483648
        %v1618 = vsel %vm1535, %v1617, %v1616
        %v1619 = vsub.s32 4, %v1595
        %v1620 = vsel %vm1535, %v1619, %v1595
        %v1621 = vsel %vm1534, %v487, %v1618
        %v1622 = vsel %vm1534, 0, %v1620
        %v1623 = vcosq.f32.pop %v1621
        %v1624 = vsinq.f32.pop %v1621
        %vm1625 = vweird.f32 %v487
        %v1626 = vadd.s32 %v1622, 3
        %v1627 = vand.u32 %v1626, 3
        %vm1628 = vcmp.lt.s32.totalorder %v1627, 2
        %vm1629 = vcmp.eq.s32.totalorder %v1627, 0
        %v1630 = vxor.u32 %v1624, 2147483648
        %v1631 = vsel %vm1629, %v1623, %v1630
        %vm1632 = vcmp.eq.s32.totalorder %v1627, 2
        %v1633 = vxor.u32 %v1623, 2147483648
        %v1634 = vsel %vm1632, %v1633, %v1624
        %v1635 = vsel %vm1628, %v1631, %v1634
        %v1636 = vsel %vm1625, nan, %v1635
        %v1637 = vand.u32 2147483647, %v488
        %vm1638 = vcmp.le.f32.partialorder %v1637, 0.7853982
        %vm1639 = vcmp.lt.s32.totalorder %v488, 0
        %v1640 = vand.u32 %v488, 2139095040
        %v1641 = vshrl.u32 %v1640, 23
        %v1642 = vsub.s32 %v1641, 127
        %v1643 = vand.u32 2147483647, %v488
        %v1644 = vand.u32 %v1643, 8388607
        %v1645 = vor.u32 %v1644, 8388608
        %v1646 = vsub.s32 0, %v1645
        %v1647 = vadd.s32 %v1642, 1
        %vm1648 = vcmp.gt.s32.totalorder %v1647, 0
        %v1649 = vsel %vm1648, %v1647, 0
        %v1650 = vshrl.u32 %v1649, 5
        %v1651 = vand.u32 %v1649, 31
        %v1652 = vsub.s32 32, %v1651
        %v1653 = vshrl.u32 683565275, %v1652
        %v1654 = vshll.u32 683565275, %v1651
        %v1655 = vshrl.u32 2475754826, %v1652
        %v1656 = vor.u32 %v1654, %v1655
        %v1657 = vshll.u32 2475754826, %v1651
        %v1658 = vshrl.u32 2131351028, %v1652
        %v1659 = vor.u32 %v1657, %v1658
        %v1660 = vshll.u32 2131351028, %v1651
        %v1661 = vshrl.u32 2102212464, %v1652
        %v1662 = vor.u32 %v1660, %v1661
        %v1663 = vshll.u32 2102212464, %v1651
        %v1664 = vshrl.u32 920167782, %v1652
        %v1665 = vor.u32 %v1663, %v1664
        %v1666 = vshll.u32 920167782, %v1651
        %v1667 = vshrl.u32 1326507024, %v1652
        %v1668 = vor.u32 %v1666, %v1667
        %vm1669 = vcmp.lt.s32.totalorder %v1650, 1
        %vm1670 = vcmp.lt.s32.totalorder %v1650, 2
        %vm1671 = vcmp.lt.s32.totalorder %v1650, 3
        %vm1672 = vcmp.lt.s32.totalorder %v1650, 4
        %v1673 = vsel %vm1669, %v1653, %v1656
        %v1674 = vsel %vm1672, %v1662, 2102212464
        %v1675 = vsel %vm1671, %v1659, %v1674
        %v1676 = vsel %vm1670, %v1673, %v1675
        %v1677 = vsel %vm1669, %v1656, %v1659
        %v1678 = vsel %vm1672, %v1665, 920167782
        %v1679 = vsel %vm1671, %v1662, %v1678
        %v1680 = vsel %vm1670, %v1677, %v1679
        %v1681 = vsel %vm1669, %v1659, %v1662
        %v1682 = vsel %vm1672, %v1668, 1326507024
        %v1683 = vsel %vm1671, %v1665, %v1682
        %v1684 = vsel %vm1670, %v1681, %v1683
        %v1685 = vshll.u32 %v1645, 8
        %v1686 = vmul.u32.u64.compose %v1685, %v1684
        %v1687 = vextract.low.u32 %v1686
        %v1688 = vextract.high.u32 %v1686
        %v1689 = vmul.u32.u64.compose %v1685, %v1680
        %v1690 = vextract.low.u32 %v1689
        %v1691 = vextract.high.u32 %v1689
        %v1692 = vmul.u32 %v1685, %v1676
        %v1693 = vadd.s32 %v1688, %v1690
        %vm1694 = vc.u32 %v1688, %v1690
        %v1695 = vadd.s32 %v1691, 1
        %v1696 = vsel %vm1694, %v1695, %v1691
        %v1697 = vadd.s32 %v1692, %v1696
        %v1698 = vadd.s32 %v1697, 536870912
        %v1699 = vshrl.u32 %v1698, 30
        %v1700 = vshll.u32 %v1699, 30
        %v1701 = vsub.s32 %v1697, %v1700
        %vm1702 = vcmp.lt.s32.totalorder %v1701, 0
        %v1703 = vsub.s32 0, %v1701
        %v1704 = vsel %vm1702, %v1703, %v1701
        %v1705 = vclz %v1704
        %v1706 = vsub.s32 %v1705, 2
        %vm1707 = vcmp.gt.s32.totalorder 0, %v1706
        %v1708 = vsel %vm1707, 0, %v1706
        %v1709 = vsub.s32 32, %v1708
        %v1710 = vshll.u32 %v1701, %v1708
        %v1711 = vshrl.u32 %v1693, %v1709
        %v1712 = vor.u32 %v1710, %v1711
        %v1713 = vsub.s32 4294967266, %v1708
        %v1714 = vadd.s32 %v1713, 127
        %v1715 = vshll.u32 %v1714, 23
        %v1716 = vor.u32 4788187, %v1715
        %v1717 = vand.u32 2147483647, %v1716
        %v1719 = vcvt.s32.f32 %v1712
        %v1720 = vmul.f32 %v1719, %v1717
        %v1721 = vxor.u32 %v1720, 2147483648
        %v1722 = vsel %vm1639, %v1721, %v1720
        %v1723 = vsub.s32 4, %v1699
        %v1724 = vsel %vm1639, %v1723, %v1699
        %v1725 = vsel %vm1638, %v488, %v1722
        %v1726 = vsel %vm1638, 0, %v1724
        %v1727 = vcosq.f32.pop %v1725
        %v1728 = vsinq.f32.pop %v1725
        %vm1729 = vweird.f32 %v488
        %v1730 = vadd.s32 %v1726, 3
        %v1731 = vand.u32 %v1730, 3
        %vm1732 = vcmp.lt.s32.totalorder %v1731, 2
        %vm1733 = vcmp.eq.s32.totalorder %v1731, 0
        %v1734 = vxor.u32 %v1728, 2147483648
        %v1735 = vsel %vm1733, %v1727, %v1734
        %vm1736 = vcmp.eq.s32.totalorder %v1731, 2
        %v1737 = vxor.u32 %v1727, 2147483648
        %v1738 = vsel %vm1736, %v1737, %v1728
        %v1739 = vsel %vm1732, %v1735, %v1738
        %v1740 = vsel %vm1729, nan, %v1739
        %v1741 = vand.u32 2147483647, %v489
        %vm1742 = vcmp.le.f32.partialorder %v1741, 0.7853982
        %vm1743 = vcmp.lt.s32.totalorder %v489, 0
        %v1744 = vand.u32 %v489, 2139095040
        %v1745 = vshrl.u32 %v1744, 23
        %v1746 = vsub.s32 %v1745, 127
        %v1747 = vand.u32 2147483647, %v489
        %v1748 = vand.u32 %v1747, 8388607
        %v1749 = vor.u32 %v1748, 8388608
        %v1750 = vsub.s32 0, %v1749
        %v1751 = vadd.s32 %v1746, 1
        %vm1752 = vcmp.gt.s32.totalorder %v1751, 0
        %v1753 = vsel %vm1752, %v1751, 0
        %v1754 = vshrl.u32 %v1753, 5
        %v1755 = vand.u32 %v1753, 31
        %v1756 = vsub.s32 32, %v1755
        %v1757 = vshrl.u32 683565275, %v1756
        %v1758 = vshll.u32 683565275, %v1755
        %v1759 = vshrl.u32 2475754826, %v1756
        %v1760 = vor.u32 %v1758, %v1759
        %v1761 = vshll.u32 2475754826, %v1755
        %v1762 = vshrl.u32 2131351028, %v1756
        %v1763 = vor.u32 %v1761, %v1762
        %v1764 = vshll.u32 2131351028, %v1755
        %v1765 = vshrl.u32 2102212464, %v1756
        %v1766 = vor.u32 %v1764, %v1765
        %v1767 = vshll.u32 2102212464, %v1755
        %v1768 = vshrl.u32 920167782, %v1756
        %v1769 = vor.u32 %v1767, %v1768
        %v1770 = vshll.u32 920167782, %v1755
        %v1771 = vshrl.u32 1326507024, %v1756
        %v1772 = vor.u32 %v1770, %v1771
        %vm1773 = vcmp.lt.s32.totalorder %v1754, 1
        %vm1774 = vcmp.lt.s32.totalorder %v1754, 2
        %vm1775 = vcmp.lt.s32.totalorder %v1754, 3
        %vm1776 = vcmp.lt.s32.totalorder %v1754, 4
        %v1777 = vsel %vm1773, %v1757, %v1760
        %v1778 = vsel %vm1776, %v1766, 2102212464
        %v1779 = vsel %vm1775, %v1763, %v1778
        %v1780 = vsel %vm1774, %v1777, %v1779
        %v1781 = vsel %vm1773, %v1760, %v1763
        %v1782 = vsel %vm1776, %v1769, 920167782
        %v1783 = vsel %vm1775, %v1766, %v1782
        %v1784 = vsel %vm1774, %v1781, %v1783
        %v1785 = vsel %vm1773, %v1763, %v1766
        %v1786 = vsel %vm1776, %v1772, 1326507024
        %v1787 = vsel %vm1775, %v1769, %v1786
        %v1788 = vsel %vm1774, %v1785, %v1787
        %v1789 = vshll.u32 %v1749, 8
        %v1790 = vmul.u32.u64.compose %v1789, %v1788
        %v1791 = vextract.low.u32 %v1790
        %v1792 = vextract.high.u32 %v1790
        %v1793 = vmul.u32.u64.compose %v1789, %v1784
        %v1794 = vextract.low.u32 %v1793
        %v1795 = vextract.high.u32 %v1793
        %v1796 = vmul.u32 %v1789, %v1780
        %v1797 = vadd.s32 %v1792, %v1794
        %vm1798 = vc.u32 %v1792, %v1794
        %v1799 = vadd.s32 %v1795, 1
        %v1800 = vsel %vm1798, %v1799, %v1795
        %v1801 = vadd.s32 %v1796, %v1800
        %v1802 = vadd.s32 %v1801, 536870912
        %v1803 = vshrl.u32 %v1802, 30
        %v1804 = vshll.u32 %v1803, 30
        %v1805 = vsub.s32 %v1801, %v1804
        %vm1806 = vcmp.lt.s32.totalorder %v1805, 0
        %v1807 = vsub.s32 0, %v1805
        %v1808 = vsel %vm1806, %v1807, %v1805
        %v1809 = vclz %v1808
        %v1810 = vsub.s32 %v1809, 2
        %vm1811 = vcmp.gt.s32.totalorder 0, %v1810
        %v1812 = vsel %vm1811, 0, %v1810
        %v1813 = vsub.s32 32, %v1812
        %v1814 = vshll.u32 %v1805, %v1812
        %v1815 = vshrl.u32 %v1797, %v1813
        %v1816 = vor.u32 %v1814, %v1815
        %v1817 = vsub.s32 4294967266, %v1812
        %v1818 = vadd.s32 %v1817, 127
        %v1819 = vshll.u32 %v1818, 23
        %v1820 = vor.u32 4788187, %v1819
        %v1821 = vand.u32 2147483647, %v1820
        %v1823 = vcvt.s32.f32 %v1816
        %v1824 = vmul.f32 %v1823, %v1821
        %v1825 = vxor.u32 %v1824, 2147483648
        %v1826 = vsel %vm1743, %v1825, %v1824
        %v1827 = vsub.s32 4, %v1803
        %v1828 = vsel %vm1743, %v1827, %v1803
        %v1829 = vsel %vm1742, %v489, %v1826
        %v1830 = vsel %vm1742, 0, %v1828
        %v1831 = vcosq.f32.pop %v1829
        %v1832 = vsinq.f32.pop %v1829
        %vm1833 = vweird.f32 %v489
        %v1834 = vadd.s32 %v1830, 3
        %v1835 = vand.u32 %v1834, 3
        %vm1836 = vcmp.lt.s32.totalorder %v1835, 2
        %vm1837 = vcmp.eq.s32.totalorder %v1835, 0
        %v1838 = vxor.u32 %v1832, 2147483648
        %v1839 = vsel %vm1837, %v1831, %v1838
        %vm1840 = vcmp.eq.s32.totalorder %v1835, 2
        %v1841 = vxor.u32 %v1831, 2147483648
        %v1842 = vsel %vm1840, %v1841, %v1832
        %v1843 = vsel %vm1836, %v1839, %v1842
        %v1844 = vsel %vm1833, nan, %v1843
        %v1845 = vand.u32 2147483647, %v490
        %vm1846 = vcmp.le.f32.partialorder %v1845, 0.7853982
        %vm1847 = vcmp.lt.s32.totalorder %v490, 0
        %v1848 = vand.u32 %v490, 2139095040
        %v1849 = vshrl.u32 %v1848, 23
        %v1850 = vsub.s32 %v1849, 127
        %v1851 = vand.u32 2147483647, %v490
        %v1852 = vand.u32 %v1851, 8388607
        %v1853 = vor.u32 %v1852, 8388608
        %v1854 = vsub.s32 0, %v1853
        %v1855 = vadd.s32 %v1850, 1
        %vm1856 = vcmp.gt.s32.totalorder %v1855, 0
        %v1857 = vsel %vm1856, %v1855, 0
        %v1858 = vshrl.u32 %v1857, 5
        %v1859 = vand.u32 %v1857, 31
        %v1860 = vsub.s32 32, %v1859
        %v1861 = vshrl.u32 683565275, %v1860
        %v1862 = vshll.u32 683565275, %v1859
        %v1863 = vshrl.u32 2475754826, %v1860
        %v1864 = vor.u32 %v1862, %v1863
        %v1865 = vshll.u32 2475754826, %v1859
        %v1866 = vshrl.u32 2131351028, %v1860
        %v1867 = vor.u32 %v1865, %v1866
        %v1868 = vshll.u32 2131351028, %v1859
        %v1869 = vshrl.u32 2102212464, %v1860
        %v1870 = vor.u32 %v1868, %v1869
        %v1871 = vshll.u32 2102212464, %v1859
        %v1872 = vshrl.u32 920167782, %v1860
        %v1873 = vor.u32 %v1871, %v1872
        %v1874 = vshll.u32 920167782, %v1859
        %v1875 = vshrl.u32 1326507024, %v1860
        %v1876 = vor.u32 %v1874, %v1875
        %vm1877 = vcmp.lt.s32.totalorder %v1858, 1
        %vm1878 = vcmp.lt.s32.totalorder %v1858, 2
        %vm1879 = vcmp.lt.s32.totalorder %v1858, 3
        %vm1880 = vcmp.lt.s32.totalorder %v1858, 4
        %v1881 = vsel %vm1877, %v1861, %v1864
        %v1882 = vsel %vm1880, %v1870, 2102212464
        %v1883 = vsel %vm1879, %v1867, %v1882
        %v1884 = vsel %vm1878, %v1881, %v1883
        %v1885 = vsel %vm1877, %v1864, %v1867
        %v1886 = vsel %vm1880, %v1873, 920167782
        %v1887 = vsel %vm1879, %v1870, %v1886
        %v1888 = vsel %vm1878, %v1885, %v1887
        %v1889 = vsel %vm1877, %v1867, %v1870
        %v1890 = vsel %vm1880, %v1876, 1326507024
        %v1891 = vsel %vm1879, %v1873, %v1890
        %v1892 = vsel %vm1878, %v1889, %v1891
        %v1893 = vshll.u32 %v1853, 8
        %v1894 = vmul.u32.u64.compose %v1893, %v1892
        %v1895 = vextract.low.u32 %v1894
        %v1896 = vextract.high.u32 %v1894
        %v1897 = vmul.u32.u64.compose %v1893, %v1888
        %v1898 = vextract.low.u32 %v1897
        %v1899 = vextract.high.u32 %v1897
        %v1900 = vmul.u32 %v1893, %v1884
        %v1901 = vadd.s32 %v1896, %v1898
        %vm1902 = vc.u32 %v1896, %v1898
        %v1903 = vadd.s32 %v1899, 1
        %v1904 = vsel %vm1902, %v1903, %v1899
        %v1905 = vadd.s32 %v1900, %v1904
        %v1906 = vadd.s32 %v1905, 536870912
        %v1907 = vshrl.u32 %v1906, 30
        %v1908 = vshll.u32 %v1907, 30
        %v1909 = vsub.s32 %v1905, %v1908
        %vm1910 = vcmp.lt.s32.totalorder %v1909, 0
        %v1911 = vsub.s32 0, %v1909
        %v1912 = vsel %vm1910, %v1911, %v1909
        %v1913 = vclz %v1912
        %v1914 = vsub.s32 %v1913, 2
        %vm1915 = vcmp.gt.s32.totalorder 0, %v1914
        %v1916 = vsel %vm1915, 0, %v1914
        %v1917 = vsub.s32 32, %v1916
        %v1918 = vshll.u32 %v1909, %v1916
        %v1919 = vshrl.u32 %v1901, %v1917
        %v1920 = vor.u32 %v1918, %v1919
        %v1921 = vsub.s32 4294967266, %v1916
        %v1922 = vadd.s32 %v1921, 127
        %v1923 = vshll.u32 %v1922, 23
        %v1924 = vor.u32 4788187, %v1923
        %v1925 = vand.u32 2147483647, %v1924
        %v1927 = vcvt.s32.f32 %v1920
        %v1928 = vmul.f32 %v1927, %v1925
        %v1929 = vxor.u32 %v1928, 2147483648
        %v1930 = vsel %vm1847, %v1929, %v1928
        %v1931 = vsub.s32 4, %v1907
        %v1932 = vsel %vm1847, %v1931, %v1907
        %v1933 = vsel %vm1846, %v490, %v1930
        %v1934 = vsel %vm1846, 0, %v1932
        %v1935 = vcosq.f32.pop %v1933
        %v1936 = vsinq.f32.pop %v1933
        %vm1937 = vweird.f32 %v490
        %v1938 = vadd.s32 %v1934, 3
        %v1939 = vand.u32 %v1938, 3
        %vm1940 = vcmp.lt.s32.totalorder %v1939, 2
        %vm1941 = vcmp.eq.s32.totalorder %v1939, 0
        %v1942 = vxor.u32 %v1936, 2147483648
        %v1943 = vsel %vm1941, %v1935, %v1942
        %vm1944 = vcmp.eq.s32.totalorder %v1939, 2
        %v1945 = vxor.u32 %v1935, 2147483648
        %v1946 = vsel %vm1944, %v1945, %v1936
        %v1947 = vsel %vm1940, %v1943, %v1946
        %v1948 = vsel %vm1937, nan, %v1947
        %v1949 = vand.u32 2147483647, %v491
        %vm1950 = vcmp.le.f32.partialorder %v1949, 0.7853982
        %vm1951 = vcmp.lt.s32.totalorder %v491, 0
        %v1952 = vand.u32 %v491, 2139095040
        %v1953 = vshrl.u32 %v1952, 23
        %v1954 = vsub.s32 %v1953, 127
        %v1955 = vand.u32 2147483647, %v491
        %v1956 = vand.u32 %v1955, 8388607
        %v1957 = vor.u32 %v1956, 8388608
        %v1958 = vsub.s32 0, %v1957
        %v1959 = vadd.s32 %v1954, 1
        %vm1960 = vcmp.gt.s32.totalorder %v1959, 0
        %v1961 = vsel %vm1960, %v1959, 0
        %v1962 = vshrl.u32 %v1961, 5
        %v1963 = vand.u32 %v1961, 31
        %v1964 = vsub.s32 32, %v1963
        %v1965 = vshrl.u32 683565275, %v1964
        %v1966 = vshll.u32 683565275, %v1963
        %v1967 = vshrl.u32 2475754826, %v1964
        %v1968 = vor.u32 %v1966, %v1967
        %v1969 = vshll.u32 2475754826, %v1963
        %v1970 = vshrl.u32 2131351028, %v1964
        %v1971 = vor.u32 %v1969, %v1970
        %v1972 = vshll.u32 2131351028, %v1963
        %v1973 = vshrl.u32 2102212464, %v1964
        %v1974 = vor.u32 %v1972, %v1973
        %v1975 = vshll.u32 2102212464, %v1963
        %v1976 = vshrl.u32 920167782, %v1964
        %v1977 = vor.u32 %v1975, %v1976
        %v1978 = vshll.u32 920167782, %v1963
        %v1979 = vshrl.u32 1326507024, %v1964
        %v1980 = vor.u32 %v1978, %v1979
        %vm1981 = vcmp.lt.s32.totalorder %v1962, 1
        %vm1982 = vcmp.lt.s32.totalorder %v1962, 2
        %vm1983 = vcmp.lt.s32.totalorder %v1962, 3
        %vm1984 = vcmp.lt.s32.totalorder %v1962, 4
        %v1985 = vsel %vm1981, %v1965, %v1968
        %v1986 = vsel %vm1984, %v1974, 2102212464
        %v1987 = vsel %vm1983, %v1971, %v1986
        %v1988 = vsel %vm1982, %v1985, %v1987
        %v1989 = vsel %vm1981, %v1968, %v1971
        %v1990 = vsel %vm1984, %v1977, 920167782
        %v1991 = vsel %vm1983, %v1974, %v1990
        %v1992 = vsel %vm1982, %v1989, %v1991
        %v1993 = vsel %vm1981, %v1971, %v1974
        %v1994 = vsel %vm1984, %v1980, 1326507024
        %v1995 = vsel %vm1983, %v1977, %v1994
        %v1996 = vsel %vm1982, %v1993, %v1995
        %v1997 = vshll.u32 %v1957, 8
        %v1998 = vmul.u32.u64.compose %v1997, %v1996
        %v1999 = vextract.low.u32 %v1998
        %v2000 = vextract.high.u32 %v1998
        %v2001 = vmul.u32.u64.compose %v1997, %v1992
        %v2002 = vextract.low.u32 %v2001
        %v2003 = vextract.high.u32 %v2001
        %v2004 = vmul.u32 %v1997, %v1988
        %v2005 = vadd.s32 %v2000, %v2002
        %vm2006 = vc.u32 %v2000, %v2002
        %v2007 = vadd.s32 %v2003, 1
        %v2008 = vsel %vm2006, %v2007, %v2003
        %v2009 = vadd.s32 %v2004, %v2008
        %v2010 = vadd.s32 %v2009, 536870912
        %v2011 = vshrl.u32 %v2010, 30
        %v2012 = vshll.u32 %v2011, 30
        %v2013 = vsub.s32 %v2009, %v2012
        %vm2014 = vcmp.lt.s32.totalorder %v2013, 0
        %v2015 = vsub.s32 0, %v2013
        %v2016 = vsel %vm2014, %v2015, %v2013
        %v2017 = vclz %v2016
        %v2018 = vsub.s32 %v2017, 2
        %vm2019 = vcmp.gt.s32.totalorder 0, %v2018
        %v2020 = vsel %vm2019, 0, %v2018
        %v2021 = vsub.s32 32, %v2020
        %v2022 = vshll.u32 %v2013, %v2020
        %v2023 = vshrl.u32 %v2005, %v2021
        %v2024 = vor.u32 %v2022, %v2023
        %v2025 = vsub.s32 4294967266, %v2020
        %v2026 = vadd.s32 %v2025, 127
        %v2027 = vshll.u32 %v2026, 23
        %v2028 = vor.u32 4788187, %v2027
        %v2029 = vand.u32 2147483647, %v2028
        %v2031 = vcvt.s32.f32 %v2024
        %v2032 = vmul.f32 %v2031, %v2029
        %v2033 = vxor.u32 %v2032, 2147483648
        %v2034 = vsel %vm1951, %v2033, %v2032
        %v2035 = vsub.s32 4, %v2011
        %v2036 = vsel %vm1951, %v2035, %v2011
        %v2037 = vsel %vm1950, %v491, %v2034
        %v2038 = vsel %vm1950, 0, %v2036
        %v2039 = vcosq.f32.pop %v2037
        %v2040 = vsinq.f32.pop %v2037
        %vm2041 = vweird.f32 %v491
        %v2042 = vadd.s32 %v2038, 3
        %v2043 = vand.u32 %v2042, 3
        %vm2044 = vcmp.lt.s32.totalorder %v2043, 2
        %vm2045 = vcmp.eq.s32.totalorder %v2043, 0
        %v2046 = vxor.u32 %v2040, 2147483648
        %v2047 = vsel %vm2045, %v2039, %v2046
        %vm2048 = vcmp.eq.s32.totalorder %v2043, 2
        %v2049 = vxor.u32 %v2039, 2147483648
        %v2050 = vsel %vm2048, %v2049, %v2040
        %v2051 = vsel %vm2044, %v2047, %v2050
        %v2052 = vsel %vm2041, nan, %v2051
        %v2053 = vand.u32 2147483647, %v492
        %vm2054 = vcmp.le.f32.partialorder %v2053, 0.7853982
        %vm2055 = vcmp.lt.s32.totalorder %v492, 0
        %v2056 = vand.u32 %v492, 2139095040
        %v2057 = vshrl.u32 %v2056, 23
        %v2058 = vsub.s32 %v2057, 127
        %v2059 = vand.u32 2147483647, %v492
        %v2060 = vand.u32 %v2059, 8388607
        %v2061 = vor.u32 %v2060, 8388608
        %v2062 = vsub.s32 0, %v2061
        %v2063 = vadd.s32 %v2058, 1
        %vm2064 = vcmp.gt.s32.totalorder %v2063, 0
        %v2065 = vsel %vm2064, %v2063, 0
        %v2066 = vshrl.u32 %v2065, 5
        %v2067 = vand.u32 %v2065, 31
        %v2068 = vsub.s32 32, %v2067
        %v2069 = vshrl.u32 683565275, %v2068
        %v2070 = vshll.u32 683565275, %v2067
        %v2071 = vshrl.u32 2475754826, %v2068
        %v2072 = vor.u32 %v2070, %v2071
        %v2073 = vshll.u32 2475754826, %v2067
        %v2074 = vshrl.u32 2131351028, %v2068
        %v2075 = vor.u32 %v2073, %v2074
        %v2076 = vshll.u32 2131351028, %v2067
        %v2077 = vshrl.u32 2102212464, %v2068
        %v2078 = vor.u32 %v2076, %v2077
        %v2079 = vshll.u32 2102212464, %v2067
        %v2080 = vshrl.u32 920167782, %v2068
        %v2081 = vor.u32 %v2079, %v2080
        %v2082 = vshll.u32 920167782, %v2067
        %v2083 = vshrl.u32 1326507024, %v2068
        %v2084 = vor.u32 %v2082, %v2083
        %vm2085 = vcmp.lt.s32.totalorder %v2066, 1
        %vm2086 = vcmp.lt.s32.totalorder %v2066, 2
        %vm2087 = vcmp.lt.s32.totalorder %v2066, 3
        %vm2088 = vcmp.lt.s32.totalorder %v2066, 4
        %v2089 = vsel %vm2085, %v2069, %v2072
        %v2090 = vsel %vm2088, %v2078, 2102212464
        %v2091 = vsel %vm2087, %v2075, %v2090
        %v2092 = vsel %vm2086, %v2089, %v2091
        %v2093 = vsel %vm2085, %v2072, %v2075
        %v2094 = vsel %vm2088, %v2081, 920167782
        %v2095 = vsel %vm2087, %v2078, %v2094
        %v2096 = vsel %vm2086, %v2093, %v2095
        %v2097 = vsel %vm2085, %v2075, %v2078
        %v2098 = vsel %vm2088, %v2084, 1326507024
        %v2099 = vsel %vm2087, %v2081, %v2098
        %v2100 = vsel %vm2086, %v2097, %v2099
        %v2101 = vshll.u32 %v2061, 8
        %v2102 = vmul.u32.u64.compose %v2101, %v2100
        %v2103 = vextract.low.u32 %v2102
        %v2104 = vextract.high.u32 %v2102
        %v2105 = vmul.u32.u64.compose %v2101, %v2096
        %v2106 = vextract.low.u32 %v2105
        %v2107 = vextract.high.u32 %v2105
        %v2108 = vmul.u32 %v2101, %v2092
        %v2109 = vadd.s32 %v2104, %v2106
        %vm2110 = vc.u32 %v2104, %v2106
        %v2111 = vadd.s32 %v2107, 1
        %v2112 = vsel %vm2110, %v2111, %v2107
        %v2113 = vadd.s32 %v2108, %v2112
        %v2114 = vadd.s32 %v2113, 536870912
        %v2115 = vshrl.u32 %v2114, 30
        %v2116 = vshll.u32 %v2115, 30
        %v2117 = vsub.s32 %v2113, %v2116
        %vm2118 = vcmp.lt.s32.totalorder %v2117, 0
        %v2119 = vsub.s32 0, %v2117
        %v2120 = vsel %vm2118, %v2119, %v2117
        %v2121 = vclz %v2120
        %v2122 = vsub.s32 %v2121, 2
        %vm2123 = vcmp.gt.s32.totalorder 0, %v2122
        %v2124 = vsel %vm2123, 0, %v2122
        %v2125 = vsub.s32 32, %v2124
        %v2126 = vshll.u32 %v2117, %v2124
        %v2127 = vshrl.u32 %v2109, %v2125
        %v2128 = vor.u32 %v2126, %v2127
        %v2129 = vsub.s32 4294967266, %v2124
        %v2130 = vadd.s32 %v2129, 127
        %v2131 = vshll.u32 %v2130, 23
        %v2132 = vor.u32 4788187, %v2131
        %v2133 = vand.u32 2147483647, %v2132
        %v2135 = vcvt.s32.f32 %v2128
        %v2136 = vmul.f32 %v2135, %v2133
        %v2137 = vxor.u32 %v2136, 2147483648
        %v2138 = vsel %vm2055, %v2137, %v2136
        %v2139 = vsub.s32 4, %v2115
        %v2140 = vsel %vm2055, %v2139, %v2115
        %v2141 = vsel %vm2054, %v492, %v2138
        %v2142 = vsel %vm2054, 0, %v2140
        %v2143 = vcosq.f32.pop %v2141
        %v2144 = vsinq.f32.pop %v2141
        %vm2145 = vweird.f32 %v492
        %v2146 = vadd.s32 %v2142, 3
        %v2147 = vand.u32 %v2146, 3
        %vm2148 = vcmp.lt.s32.totalorder %v2147, 2
        %vm2149 = vcmp.eq.s32.totalorder %v2147, 0
        %v2150 = vxor.u32 %v2144, 2147483648
        %v2151 = vsel %vm2149, %v2143, %v2150
        %vm2152 = vcmp.eq.s32.totalorder %v2147, 2
        %v2153 = vxor.u32 %v2143, 2147483648
        %v2154 = vsel %vm2152, %v2153, %v2144
        %v2155 = vsel %vm2148, %v2151, %v2154
        %v2156 = vsel %vm2145, nan, %v2155
        %2157 = vst [vmem:[%s270] sm:$0xff] %v596
        %2158 = vst [vmem:[%s270 + $0x8] sm:$0xff] %v700
        %2159 = vst [vmem:[%s270 + $0x10] sm:$0xff] %v804
        %2160 = vst [vmem:[%s270 + $0x18] sm:$0xff] %v908
        %2161 = vst [vmem:[%s270 + $0x20] sm:$0xff] %v1012
        %2162 = vst [vmem:[%s270 + $0x28] sm:$0xff] %v1116
        %2163 = vst [vmem:[%s270 + $0x30] sm:$0xff] %v1220
        %2164 = vst [vmem:[%s270 + $0x38] sm:$0xff] %v1324
        %2165 = vst [vmem:[%s270 + $0x40] sm:$0xff] %v1428
        %2166 = vst [vmem:[%s270 + $0x48] sm:$0xff] %v1532
        %2167 = vst [vmem:[%s270 + $0x50] sm:$0xff] %v1636
        %2168 = vst [vmem:[%s270 + $0x58] sm:$0xff] %v1740
        %2169 = vst [vmem:[%s270 + $0x60] sm:$0xff] %v1844
        %2170 = vst [vmem:[%s270 + $0x68] sm:$0xff] %v1948
        %2171 = vst [vmem:[%s270 + $0x70] sm:$0xff] %v2052
        %2172 = vst [vmem:[%s270 + $0x78] sm:$0xff] %v2156
        %s2173 = sand.u32 %s148, 1
        %s2174 = scalar_lea.sflag [#allocation4], %s2173
        %s2175 = sand.u32 %s148, 1
        %s2176 = smul.addr %s2175, 128
        %s2177 = scalar_lea.vmem [#allocation7], %s2176
        // Predicated region
        $region49: #{tpu_custom_call.1} parent=39 // pred_check
          %p2178 = pneg %p158
        $region50: #{tpu_custom_call.1} parent=39 // pred_check_branch
          %2180 = sbr.rel (%p2178) target = $region52
        $region51: #{tpu_custom_call.1} parent=39 // pred_region
          %s2181 = smul.u32 16, %s25
          %s2183 = ssub.s32 2048, 2048
          %2184 = vsyncadd %s2174, %s2183
          %s2185 = smul.addr %s2181, 128
          %s2186 = scalar_lea.hbm %s5, %s2185
          %s2187 = sshll.u32 %s2177, 4
          %s2188 = int_to_ptr.vmem [resolvable:$true] %s2187
          %2193 = dma.vmem_to_hbm [thread:$0]  %s2188, 2048, %s2186, %s2174, 128, 128, 8
        $region52: #{tpu_custom_call.1} parent=39 // pred_fallthru
          _
      $region40: #{tpu_custom_call.1} parent=5 // pred_fallthru
        _
      %p2194 = scmp.le.s32.totalorder 2, %s20
      // Predicated region
      $region53: #{tpu_custom_call.1} parent=5 // pred_check
        %p2195 = pneg %p2194
      $region54: #{tpu_custom_call.1} parent=5 // pred_check_branch
        %2197 = sbr.rel (%p2195) target = $region56
      $region55: #{tpu_custom_call.1} parent=5 // pred_region
        %s2198 = ssub.s32 %s20, 2
        // Predicated region
        $region57: #{tpu_custom_call.1} parent=55 // pred_check
          %p2199 = pneg %p164
        $region58: #{tpu_custom_call.1} parent=55 // pred_check_branch
          %2201 = sbr.rel (%p2199) target = $region60
        $region59: #{tpu_custom_call.1} parent=55 // pred_region
          %s2202 = sand.u32 %s149, 1
          %s2203 = scalar_lea.sflag [#allocation4], %s2202
          %s2204 = sand.u32 %s149, 1
          %s2205 = smul.addr %s2204, 128
          %s2206 = scalar_lea.vmem [#allocation7], %s2205
          %2207 = dma.done %s2203, 2048
        $region60: #{tpu_custom_call.1} parent=55 // pred_fallthru
          _
      $region56: #{tpu_custom_call.1} parent=5 // pred_fallthru
        _
    $region6: #{tpu_custom_call.1} parent=1 // loop_footer
      %s24 = sadd.s32 1, %s20
    $region7: #{tpu_custom_call.1} parent=1 // loop_footer_branch
      %19 = sbr.rel target = $region3
    $region8: #{tpu_custom_call.1} parent=1 // loop_exit
      _
    %2208 = vsyncpa [#allocation3], 1
    %s2209 = scalar_lea.sflag [#allocation3], 1
    %2210 = vsyncpa %s2209, 1
    %2211 = vsyncpa [#allocation6], 1
    %s2212 = scalar_lea.sflag [#allocation6], 1
    %2213 = vsyncpa %s2212, 1
    %2214 = vsyncpa [#allocation4], 1
    %s2215 = scalar_lea.sflag [#allocation4], 1
    %2216 = vsyncpa %s2215, 1

</llo_original>
